<compile_context>
chip_gen: v7x
topology: tpu7x:2x2x1
jax: 0.10.0
libtpu: 0.0.40
codegen_flags: <defaults>
</compile_context>

<pallas_src>
import functools

import jax
import jax.numpy as jnp
from jax.experimental import pallas as pl
from jax.experimental.pallas import tpu as pltpu

raw_text = (
    'We are about to study the idea of a computational process.\n'
    'Computational processes are abstract beings that inhabit computers.\n'
    'As they evolve, processes manipulate other abstract things called data.\n'
    'The evolution of a process is directed by a pattern of rules\n'
    'called a program. People create programs to direct processes. In effect,\n'
    'we conjure the spirits of the computer with our spells.'
).split()

vocab = set(raw_text)
VOCAB_SIZE = len(vocab)            # 49, same as the PyTorch script
EMBEDDING_DIM = 16
CONTEXT_SIZE = 2
N_CTX = 2 * CONTEXT_SIZE           # 4 context word ids per example
HIDDEN = 128
D_IN = N_CTX * EMBEDDING_DIM       # 64
V_PAD = 128                        # vocab padded to one lane width
NEG_INF = -1e30
TILE_B = 256                       # requested batch rows per grid step

assert HIDDEN == V_PAD, "bias packing below assumes HIDDEN == V_PAD == 128"


def cbow_kernel(idx_ref, m_ref, w2_ref, bias_ref, o_ref):
    """One batch tile of the full CBOW forward.

    idx_ref : (tb, N_CTX) int32            context word ids (each < VOCAB_SIZE)
    m_ref   : (N_CTX*V_PAD, HIDDEN) bf16   fused emb@W1 table (pad rows are zero)
    w2_ref  : (HIDDEN, V_PAD) bf16         (cols >= VOCAB_SIZE are zero)
    bias_ref: (2, V_PAD) f32               row 0 = b1, row 1 = b2 (padded with zeros)
    o_ref   : (tb, V_PAD) f32              log-probs (pad lanes ~= -1e30)
    """
    tb = idx_ref.shape[0]
    idx = idx_ref[...]                                                   # (tb, N_CTX)

    # Concatenated one-hot over all N_CTX context slots, built in one pass:
    # onehot[b, j*V_PAD + v] = (idx[b, j] == v).  Blocks are disjoint since
    # idx < VOCAB_SIZE < V_PAD, so a lane-iota compared against idx + j*V_PAD works.
    lane = jax.lax.broadcasted_iota(jnp.int32, (tb, N_CTX * V_PAD), 1)
    hit = lane == idx[:, 0:1]
    for j in range(1, N_CTX):
        hit = hit | (lane == (idx[:, j:j + 1] + j * V_PAD))
    onehot = hit.astype(m_ref.dtype)                                     # (tb, 512) bf16

    # Fused embedding-gather + linear1: one (tb,512)x(512,128) MXU matmul.
    h = jnp.dot(onehot, m_ref[...], preferred_element_type=jnp.float32)  # (tb, HIDDEN)
    h = jnp.maximum(h + bias_ref[0:1, :], 0.0)                           # ReLU in f32

    # linear2: (tb,128)x(128,128).
    logits = jnp.dot(h.astype(w2_ref.dtype), w2_ref[...],
                     preferred_element_type=jnp.float32) + bias_ref[1:2, :]

    # Mask padded vocab lanes so log_softmax normalizes only over real classes.
    vlane = jax.lax.broadcasted_iota(jnp.int32, (tb, V_PAD), 1)
    logits = jnp.where(vlane < VOCAB_SIZE, logits, NEG_INF)
    m = jnp.max(logits, axis=-1, keepdims=True)
    shifted = logits - m
    sumexp = jnp.sum(jnp.exp(shifted), axis=-1, keepdims=True)
    o_ref[...] = (shifted - jnp.log(sumexp)).astype(o_ref.dtype)


def _pallas_cbow(idx_p, m_fused, w2, bias, *, tile_b):
    b_pad = idx_p.shape[0]
    grid = (b_pad // tile_b,)
    flops = 2 * b_pad * (N_CTX * V_PAD * HIDDEN + HIDDEN * V_PAD)
    bytes_acc = (idx_p.size * 4 + m_fused.size * 2 + w2.size * 2
                 + bias.size * 4 + b_pad * V_PAD * 4)
    return pl.pallas_call(
        cbow_kernel,
        out_shape=jax.ShapeDtypeStruct((b_pad, V_PAD), jnp.float32),
        grid_spec=pltpu.PrefetchScalarGridSpec(
            num_scalar_prefetch=0,
            grid=grid,
            in_specs=[
                pl.BlockSpec((tile_b, N_CTX), lambda i: (i, 0)),
                pl.BlockSpec((N_CTX * V_PAD, HIDDEN), lambda i: (0, 0)),
                pl.BlockSpec((HIDDEN, V_PAD), lambda i: (0, 0)),
                pl.BlockSpec((2, V_PAD), lambda i: (0, 0)),
            ],
            out_specs=pl.BlockSpec((tile_b, V_PAD), lambda i: (i, 0)),
        ),
        compiler_params=pltpu.CompilerParams(
            dimension_semantics=("parallel",)),
        cost_estimate=pl.CostEstimate(
            flops=flops,
            transcendentals=b_pad * (V_PAD + 1),
            bytes_accessed=bytes_acc),
    )(idx_p, m_fused, w2, bias)


@functools.partial(jax.jit, static_argnames=("tile_b",))
def cbow_forward_batched(idx_batch, m_fused, w2, bias, *, tile_b=TILE_B):
    """idx_batch: int32 (B, N_CTX) -> f32 (B, VOCAB_SIZE) log-probs.

    Note: indices in [VOCAB_SIZE, V_PAD) silently select a zero embedding row
    (unlike PyTorch, which would raise); callers must pass valid ids.
    """
    B = idx_batch.shape[0]
    # Cap the tile so the grid keeps >= 2 steps whenever B allows (v7x has 2
    # TensorCores sharing the "parallel" axis), but never below 128 rows.
    half_rounded = (((B + 1) // 2) + 127) // 128 * 128
    eff_tile = max(128, min(tile_b, half_rounded))
    b_pad = ((B + eff_tile - 1) // eff_tile) * eff_tile
    idx_p = jnp.pad(idx_batch.astype(jnp.int32), ((0, b_pad - B), (0, 0)))
    out = _pallas_cbow(idx_p, m_fused, w2, bias, tile_b=eff_tile)
    return out[:B, :VOCAB_SIZE]


def cbow_forward(inputs, m_fused, w2, bias):
    """Matches the PyTorch forward: int (N_CTX,) -> (1, VOCAB_SIZE) log-probs."""
    return cbow_forward_batched(inputs.reshape(1, N_CTX), m_fused, w2, bias)


def init_params(key):
    """PyTorch-style init, then build the fused kernel layout:
       M = emb @ W1 per context slot (bf16), padded w2 (bf16), stacked biases (f32)."""
    k_emb, k_w1, k_b1, k_w2, k_b2 = jax.random.split(key, 5)
    embed_w = jax.random.normal(k_emb, (VOCAB_SIZE, EMBEDDING_DIM), jnp.float32)  # N(0,1)
    bound1 = 1.0 / jnp.sqrt(D_IN)
    w1 = jax.random.uniform(k_w1, (D_IN, HIDDEN), jnp.float32, -bound1, bound1)
    b1 = jax.random.uniform(k_b1, (HIDDEN,), jnp.float32, -bound1, bound1)
    bound2 = 1.0 / jnp.sqrt(HIDDEN)
    w2 = jax.random.uniform(k_w2, (HIDDEN, VOCAB_SIZE), jnp.float32, -bound2, bound2)
    b2 = jax.random.uniform(k_b2, (VOCAB_SIZE,), jnp.float32, -bound2, bound2)

    emb_p = jnp.zeros((V_PAD, EMBEDDING_DIM), jnp.float32).at[:VOCAB_SIZE].set(embed_w)
    # Fused embedding-gather x linear1 table, computed once in f32 then cast to bf16:
    #   M[j*V_PAD + v, :] = emb_p[v] @ W1[j*E:(j+1)*E, :]
    w1_r = w1.reshape(N_CTX, EMBEDDING_DIM, HIDDEN)
    m_fused = jnp.einsum('ve,jeh->jvh', emb_p, w1_r).reshape(
        N_CTX * V_PAD, HIDDEN).astype(jnp.bfloat16)

    w2_p = jnp.zeros((HIDDEN, V_PAD), jnp.bfloat16).at[:, :VOCAB_SIZE].set(
        w2.astype(jnp.bfloat16))
    bias = jnp.zeros((2, V_PAD), jnp.float32)
    bias = bias.at[0, :HIDDEN].set(b1)
    bias = bias.at[1, :VOCAB_SIZE].set(b2)
    return m_fused, w2_p, bias


def cbow_reference(idx_batch, m_fused, w2, bias):
    """Pure-JAX reference mirroring the kernel's bf16 operand rounding."""
    m_f = m_fused.astype(jnp.float32).reshape(N_CTX, V_PAD, HIDDEN)
    h = sum(m_f[j][idx_batch[:, j]] for j in range(N_CTX))               # gather + sum (f32)
    h = jnp.maximum(h + bias[0:1, :], 0.0)
    h = h.astype(jnp.bfloat16).astype(jnp.float32)                       # mirror bf16 MXU feed
    logits = h @ w2.astype(jnp.float32) + bias[1:2, :]
    logits = jnp.where(jnp.arange(V_PAD)[None, :] < VOCAB_SIZE, logits, NEG_INF)
    return jax.nn.log_softmax(logits, axis=-1)[:, :VOCAB_SIZE]


if __name__ == "__main__":
    key = jax.random.PRNGKey(0)
    params = init_params(key)

    # A batch of 256 deterministic context windows (each N_CTX word ids).
    B = 256
    idx_batch = jax.random.randint(
        jax.random.PRNGKey(0), (B, N_CTX), 0, VOCAB_SIZE, dtype=jnp.int32)

    log_prob = cbow_forward_batched(idx_batch, *params)
    jax.block_until_ready(log_prob)

    assert log_prob.shape == (B, VOCAB_SIZE)
    # Each row must exponentiate to a probability distribution.
    row_sums = jnp.sum(jnp.exp(log_prob), axis=-1)
    assert jnp.allclose(row_sums, 1.0, atol=1e-3)

    # Cross-check against the pure-JAX reference.
    ref = cbow_reference(idx_batch, *params)
    assert jnp.allclose(log_prob, ref, atol=1e-3)

    # Single-context path (the original PyTorch forward signature).
    single = cbow_forward(idx_batch[0], *params)
    jax.block_until_ready(single)
    assert single.shape == (1, VOCAB_SIZE)
    assert jnp.allclose(single, log_prob[0:1], atol=1e-5)

    print("KERNEL_OK")
</pallas_src>

<mosaic_0001>
module attributes {stable_mosaic.version = 11 : i64} {
  func.func @cbow_kernel(%arg0: i32, %arg1: memref<128x4xi32, #tpu.memory_space<vmem>>, %arg2: memref<512x128xbf16, #tpu.memory_space<vmem>>, %arg3: memref<128x128xbf16, #tpu.memory_space<vmem>>, %arg4: memref<2x128xf32, #tpu.memory_space<vmem>>, %arg5: memref<128x128xf32, #tpu.memory_space<vmem>>) attributes {dimension_semantics = [#tpu.dimension_semantics<parallel>], iteration_bounds = array<i64: 2>, scalar_prefetch = 0 : i64, scratch_operands = 0 : i64, tpu.core_type = #tpu.core_type<tc>, window_params = [{transform_indices = @transform_0, window_bounds = array<i64: 128, 4>}, {pipeline_mode = #tpu.pipeline_mode<synchronous>, transform_indices = @transform_1, window_bounds = array<i64: 512, 128>}, {pipeline_mode = #tpu.pipeline_mode<synchronous>, transform_indices = @transform_2, window_bounds = array<i64: 128, 128>}, {pipeline_mode = #tpu.pipeline_mode<synchronous>, transform_indices = @transform_3, window_bounds = array<i64: 2, 128>}, {transform_indices = @transform_4, window_bounds = array<i64: 128, 128>}]} {
    %c0 = arith.constant 0 : index
    %c0_0 = arith.constant 0 : index
    %0 = vector.load %arg1[%c0, %c0_0] : memref<128x4xi32, #tpu.memory_space<vmem>>, vector<128x4xi32>
    %1 = tpu.iota {dimensions = array<i32: 1>} : vector<128x512xi32>
    %2 = vector.extract_strided_slice %0 {offsets = [0, 0], sizes = [128, 1], strides = [1, 1]} : vector<128x4xi32> to vector<128x1xi32>
    %3 = vector.broadcast %2 : vector<128x1xi32> to vector<128x512xi32>
    %4 = arith.cmpi eq, %1, %3 : vector<128x512xi32>
    %5 = vector.extract_strided_slice %0 {offsets = [0, 1], sizes = [128, 1], strides = [1, 1]} : vector<128x4xi32> to vector<128x1xi32>
    %c128_i32 = arith.constant 128 : i32
    %6 = vector.broadcast %c128_i32 : i32 to vector<128x1xi32>
    %7 = arith.addi %5, %6 : vector<128x1xi32>
    %8 = vector.broadcast %7 : vector<128x1xi32> to vector<128x512xi32>
    %9 = arith.cmpi eq, %1, %8 : vector<128x512xi32>
    %10 = arith.ori %4, %9 : vector<128x512xi1>
    %11 = vector.extract_strided_slice %0 {offsets = [0, 2], sizes = [128, 1], strides = [1, 1]} : vector<128x4xi32> to vector<128x1xi32>
    %c256_i32 = arith.constant 256 : i32
    %12 = vector.broadcast %c256_i32 : i32 to vector<128x1xi32>
    %13 = arith.addi %11, %12 : vector<128x1xi32>
    %14 = vector.broadcast %13 : vector<128x1xi32> to vector<128x512xi32>
    %15 = arith.cmpi eq, %1, %14 : vector<128x512xi32>
    %16 = arith.ori %10, %15 : vector<128x512xi1>
    %17 = vector.extract_strided_slice %0 {offsets = [0, 3], sizes = [128, 1], strides = [1, 1]} : vector<128x4xi32> to vector<128x1xi32>
    %c384_i32 = arith.constant 384 : i32
    %18 = vector.broadcast %c384_i32 : i32 to vector<128x1xi32>
    %19 = arith.addi %17, %18 : vector<128x1xi32>
    %20 = vector.broadcast %19 : vector<128x1xi32> to vector<128x512xi32>
    %21 = arith.cmpi eq, %1, %20 : vector<128x512xi32>
    %22 = arith.ori %16, %21 : vector<128x512xi1>
    %23 = arith.extui %22 : vector<128x512xi1> to vector<128x512xi32>
    %24 = arith.sitofp %23 : vector<128x512xi32> to vector<128x512xf32>
    %25 = arith.truncf %24 : vector<128x512xf32> to vector<128x512xbf16>
    %c0_1 = arith.constant 0 : index
    %c0_2 = arith.constant 0 : index
    %26 = vector.load %arg2[%c0_1, %c0_2] : memref<512x128xbf16, #tpu.memory_space<vmem>>, vector<512x128xbf16>
    %cst = arith.constant dense<0.000000e+00> : vector<128x128xf32>
    %27 = tpu.matmul %25, %26, %cst {dimension_numbers = #tpu.dot_dimension_numbers<[1], [0], [0], [1], [0, 0, 1, 1], [], []>} : vector<128x512xbf16>, vector<512x128xbf16>, vector<128x128xf32> -> vector<128x128xf32>
    %c0_3 = arith.constant 0 : index
    %c0_4 = arith.constant 0 : index
    %28 = vector.load %arg4[%c0_3, %c0_4] : memref<2x128xf32, #tpu.memory_space<vmem>>, vector<1x128xf32>
    %29 = vector.broadcast %28 : vector<1x128xf32> to vector<128x128xf32>
    %30 = arith.addf %27, %29 : vector<128x128xf32>
    %cst_5 = arith.constant 0.000000e+00 : f32
    %31 = vector.broadcast %cst_5 : f32 to vector<128x128xf32>
    %32 = arith.maximumf %30, %31 : vector<128x128xf32>
    %33 = arith.truncf %32 : vector<128x128xf32> to vector<128x128xbf16>
    %c0_6 = arith.constant 0 : index
    %c0_7 = arith.constant 0 : index
    %34 = vector.load %arg3[%c0_6, %c0_7] : memref<128x128xbf16, #tpu.memory_space<vmem>>, vector<128x128xbf16>
    %cst_8 = arith.constant dense<0.000000e+00> : vector<128x128xf32>
    %35 = tpu.matmul %33, %34, %cst_8 {dimension_numbers = #tpu.dot_dimension_numbers<[1], [0], [0], [1], [0, 0, 1, 1], [], []>} : vector<128x128xbf16>, vector<128x128xbf16>, vector<128x128xf32> -> vector<128x128xf32>
    %c1 = arith.constant 1 : index
    %c0_9 = arith.constant 0 : index
    %36 = vector.load %arg4[%c1, %c0_9] : memref<2x128xf32, #tpu.memory_space<vmem>>, vector<1x128xf32>
    %37 = vector.broadcast %36 : vector<1x128xf32> to vector<128x128xf32>
    %38 = arith.addf %35, %37 : vector<128x128xf32>
    %39 = tpu.iota {dimensions = array<i32: 1>} : vector<128x128xi32>
    %c49_i32 = arith.constant 49 : i32
    %40 = vector.broadcast %c49_i32 : i32 to vector<128x128xi32>
    %41 = arith.cmpi slt, %39, %40 : vector<128x128xi32>
    %cst_10 = arith.constant -1.000000e+30 : f32
    %42 = vector.broadcast %cst_10 : f32 to vector<128x128xf32>
    %43 = arith.select %41, %38, %42 : vector<128x128xi1>, vector<128x128xf32>
    %cst_11 = arith.constant dense<0xFF800000> : vector<128xf32>
    %44 = vector.multi_reduction <maximumf>, %43, %cst_11 [1] : vector<128x128xf32> to vector<128xf32>
    %45 = vector.shape_cast %44 : vector<128xf32> to vector<128x1xf32>
    %46 = vector.broadcast %45 : vector<128x1xf32> to vector<128x128xf32>
    %47 = arith.subf %43, %46 : vector<128x128xf32>
    %48 = math.exp %47 : vector<128x128xf32>
    %cst_12 = arith.constant dense<0.000000e+00> : vector<128xf32>
    %49 = vector.multi_reduction <add>, %48, %cst_12 [1] : vector<128x128xf32> to vector<128xf32>
    %50 = vector.shape_cast %49 : vector<128xf32> to vector<128x1xf32>
    %51 = math.log %50 : vector<128x1xf32>
    %52 = vector.broadcast %51 : vector<128x1xf32> to vector<128x128xf32>
    %53 = arith.subf %47, %52 : vector<128x128xf32>
    %c0_13 = arith.constant 0 : index
    %c0_14 = arith.constant 0 : index
    %54 = vector.load %arg5[%c0_13, %c0_14] : memref<128x128xf32, #tpu.memory_space<vmem>>, vector<128x128xf32>
    tpu.vector_store %arg5[%c0_13, %c0_14], %53 {strides = array<i32>} : memref<128x128xf32, #tpu.memory_space<vmem>>, vector<128x128xf32>,
    return
  }
  func.func @transform_0(%arg0: i32) -> (i32, i32) {
    %c0_i32 = arith.constant 0 : i32
    %c0_i32_0 = arith.constant 0 : i32
    return %arg0, %c0_i32 : i32, i32
  }
  func.func @transform_1(%arg0: i32) -> (i32, i32) {
    %c0_i32 = arith.constant 0 : i32
    %c0_i32_0 = arith.constant 0 : i32
    %c0_i32_1 = arith.constant 0 : i32
    return %c0_i32, %c0_i32_0 : i32, i32
  }
  func.func @transform_2(%arg0: i32) -> (i32, i32) {
    %c0_i32 = arith.constant 0 : i32
    %c0_i32_0 = arith.constant 0 : i32
    %c0_i32_1 = arith.constant 0 : i32
    return %c0_i32, %c0_i32_0 : i32, i32
  }
  func.func @transform_3(%arg0: i32) -> (i32, i32) {
    %c0_i32 = arith.constant 0 : i32
    %c0_i32_0 = arith.constant 0 : i32
    %c0_i32_1 = arith.constant 0 : i32
    return %c0_i32, %c0_i32_0 : i32, i32
  }
  func.func @transform_4(%arg0: i32) -> (i32, i32) {
    %c0_i32 = arith.constant 0 : i32
    %c0_i32_0 = arith.constant 0 : i32
    return %arg0, %c0_i32 : i32, i32
  }
}

</mosaic_0001>

<llo_original>
// kernel: cbow_forward_batched.1
$region0: #{cbow_forward_batched.1}
  #allocation0 [shape = 'u32[]', space=smem, size = 0x4, offset = 0x4, fixed_abs, tag = 'smem constant byte address 0x4 - core index']
  #allocation1 [shape = 'u32[144,128]{1,0:T(1,128)}', space=vmem, size = 0x12000, scoped, tag = 'internal scratch']
  %s0 = inlined_call_operand.vmem [shape: s32[256,4], index: 0, kind: input, shape index: {}]
  %s1 = inlined_call_operand.vmem [shape: bf16[512,128], index: 1, kind: input, shape index: {}]
  %s2 = inlined_call_operand.hbm [shape: bf16[128,128], index: 2, kind: input, shape index: {}]
  %s3 = inlined_call_operand.vmem [shape: f32[2,128], index: 3, kind: input, shape index: {}]
  %s4 = inlined_call_operand.vmem [shape: f32[256,128], index: 4, kind: output, shape index: {}]
  %s5 = sld [smem:[#allocation0]]
  $region53: #{cbow_forward_batched.1} parent=0
    _
  %s7 = ssub.s32 1, %s5
  %s8 = scalar_select 0, %s7, %s5
  $region1: #{cbow_forward_batched.1} parent=0
    #allocation2 [shape = 'u8[32768]{0}', space=vmem, size = 0x8000, scoped, tag = 'input window, operand 2, single buffered']
    #allocation3 [shape = 's32[2]{0}', space=sflag, size = 0x8, scoped, tag = 'scoped memory for cbow_forward_batched.1']
    %9 = vsyncpa [#allocation3], 0
    loop: start=0, step=1, limit=4
    $region2: #{cbow_forward_batched.1} parent=1 // loop_pre_header
      _
    $region3: #{cbow_forward_batched.1} parent=1 // loop_header
      %s11 = sphi 0, %s15
      %p12 = scmp.ge.s32.totalorder %s11, 4
      %s21 = sphi 0, %s23
      %s24 = sphi 0, %s21
      %s25 = sphi 0, %s24
      %s41 = sphi 0, %s25
      %s45 = sphi 0, %s45
      %s47 = sphi 0, %s45
      %s48 = sphi 0, %s47
      %s62 = sphi 0, %s48
      %s66 = sphi 0, %s66
      %s68 = sphi 0, %s66
      %s69 = sphi 0, %s68
      %s83 = sphi 0, %s69
      %s87 = sphi 0, %s87
      %s89 = sphi 0, %s87
      %s90 = sphi 0, %s89
      %s104 = sphi 0, %s90
      %s110 = sphi 0, %s112
      %s113 = sphi 0, %s110
      %s114 = sphi 0, %s113
      %s130 = sphi 0, %s114
    $region4: #{cbow_forward_batched.1} parent=1 // loop_header_branch
      %14 = sbr.rel (%p12) target = $region8
    $region5: #{cbow_forward_batched.1} parent=1 // loop_body
      %s16 = ssub.s32 %s11, 1
      %s17 = ssub.s32 %s11, 2
      %s18 = sadd.s32 %s11, 1
      %s19 = ssub.s32 %s11, %s18
      %p20 = scmp.eq.s32.totalorder %s19, 0
      %s22 = sadd.s32 %s21, 1
      %s23 = scalar_select %p20, %s21, %s22
      %p26 = pneg %p20
      %p27 = scmp.eq.s32.totalorder %s11, 1
      %p28 = por %p26, %p27
      %p29 = scmp.ne.s32.totalorder %s21, %s24
      %p30 = scmp.eq.s32.totalorder %s11, 0
      %p31 = por %p29, %p30
      %p32 = scmp.ne.s32.totalorder %s21, %s24
      %p33 = scmp.eq.s32.totalorder %s16, 1
      %p34 = por %p32, %p33
      %p35 = scmp.ne.s32.totalorder %s24, %s25
      %p36 = scmp.eq.s32.totalorder %s16, 0
      %p37 = por %p35, %p36
      %p38 = scmp.ne.s32.totalorder %s24, %s25
      %p39 = scmp.eq.s32.totalorder %s17, 1
      %p40 = por %p38, %p39
      %p42 = scmp.ne.s32.totalorder %s25, %s41
      %p43 = scmp.eq.s32.totalorder %s17, 0
      %p44 = por %p42, %p43
      %s46 = sadd.s32 %s45, 1
      %p49 = scmp.eq.s32.totalorder %s11, 1
      %p50 = scmp.ne.s32.totalorder %s45, %s47
      %p51 = scmp.eq.s32.totalorder %s11, 0
      %p52 = por %p50, %p51
      %p53 = scmp.ne.s32.totalorder %s45, %s47
      %p54 = scmp.eq.s32.totalorder %s16, 1
      %p55 = por %p53, %p54
      %p56 = scmp.ne.s32.totalorder %s47, %s48
      %p57 = scmp.eq.s32.totalorder %s16, 0
      %p58 = por %p56, %p57
      %p59 = scmp.ne.s32.totalorder %s47, %s48
      %p60 = scmp.eq.s32.totalorder %s17, 1
      %p61 = por %p59, %p60
      %p63 = scmp.ne.s32.totalorder %s48, %s62
      %p64 = scmp.eq.s32.totalorder %s17, 0
      %p65 = por %p63, %p64
      %s67 = sadd.s32 %s66, 1
      %p70 = scmp.eq.s32.totalorder %s11, 1
      %p71 = scmp.ne.s32.totalorder %s66, %s68
      %p72 = scmp.eq.s32.totalorder %s11, 0
      %p73 = por %p71, %p72
      %p74 = scmp.ne.s32.totalorder %s66, %s68
      %p75 = scmp.eq.s32.totalorder %s16, 1
      %p76 = por %p74, %p75
      %p77 = scmp.ne.s32.totalorder %s68, %s69
      %p78 = scmp.eq.s32.totalorder %s16, 0
      %p79 = por %p77, %p78
      %p80 = scmp.ne.s32.totalorder %s68, %s69
      %p81 = scmp.eq.s32.totalorder %s17, 1
      %p82 = por %p80, %p81
      %p84 = scmp.ne.s32.totalorder %s69, %s83
      %p85 = scmp.eq.s32.totalorder %s17, 0
      %p86 = por %p84, %p85
      %s88 = sadd.s32 %s87, 1
      %p91 = scmp.eq.s32.totalorder %s11, 1
      %p92 = scmp.ne.s32.totalorder %s87, %s89
      %p93 = scmp.eq.s32.totalorder %s11, 0
      %p94 = por %p92, %p93
      %p95 = scmp.ne.s32.totalorder %s87, %s89
      %p96 = scmp.eq.s32.totalorder %s16, 1
      %p97 = por %p95, %p96
      %p98 = scmp.ne.s32.totalorder %s89, %s90
      %p99 = scmp.eq.s32.totalorder %s16, 0
      %p100 = por %p98, %p99
      %p101 = scmp.ne.s32.totalorder %s89, %s90
      %p102 = scmp.eq.s32.totalorder %s17, 1
      %p103 = por %p101, %p102
      %p105 = scmp.ne.s32.totalorder %s90, %s104
      %p106 = scmp.eq.s32.totalorder %s17, 0
      %p107 = por %p105, %p106
      %s108 = ssub.s32 %s11, %s18
      %p109 = scmp.eq.s32.totalorder %s108, 0
      %s111 = sadd.s32 %s110, 1
      %s112 = scalar_select %p109, %s110, %s111
      %p115 = pneg %p109
      %p116 = scmp.eq.s32.totalorder %s11, 1
      %p117 = por %p115, %p116
      %p118 = scmp.ne.s32.totalorder %s110, %s113
      %p119 = scmp.eq.s32.totalorder %s11, 0
      %p120 = por %p118, %p119
      %p121 = scmp.ne.s32.totalorder %s110, %s113
      %p122 = scmp.eq.s32.totalorder %s16, 1
      %p123 = por %p121, %p122
      %p124 = scmp.ne.s32.totalorder %s113, %s114
      %p125 = scmp.eq.s32.totalorder %s16, 0
      %p126 = por %p124, %p125
      %p127 = scmp.ne.s32.totalorder %s113, %s114
      %p128 = scmp.eq.s32.totalorder %s17, 1
      %p129 = por %p127, %p128
      %p131 = scmp.ne.s32.totalorder %s114, %s130
      %p132 = scmp.eq.s32.totalorder %s17, 0
      %p133 = por %p131, %p132
      %p134 = scmp.le.s32.totalorder 1, %s11
      %p135 = scmp.lt.s32.totalorder %s11, 3
      %p136 = pnand %p134, %p135
      %p137 = pneg %p136
      // Predicated region
      $region9: #{cbow_forward_batched.1} parent=5 // pred_check
        _
      $region10: #{cbow_forward_batched.1} parent=5 // pred_check_branch
        %139 = sbr.rel (%p136) target = $region12
      $region11: #{cbow_forward_batched.1} parent=5 // pred_region
        %s140 = ssub.s32 %s11, 1
        // Predicated region
        $region13: #{cbow_forward_batched.1} parent=11 // pred_check
          %p141 = pneg %p58
        $region14: #{cbow_forward_batched.1} parent=11 // pred_check_branch
          %143 = sbr.rel (%p141) target = $region16
        $region15: #{cbow_forward_batched.1} parent=11 // pred_region
          _
        $region16: #{cbow_forward_batched.1} parent=11 // pred_fallthru
          _
        // Predicated region
        $region17: #{cbow_forward_batched.1} parent=11 // pred_check
          %p144 = pneg %p79
        $region18: #{cbow_forward_batched.1} parent=11 // pred_check_branch
          %146 = sbr.rel (%p144) target = $region20
        $region19: #{cbow_forward_batched.1} parent=11 // pred_region
          %s148 = ssub.s32 1024, 1024
          %149 = vsyncadd [#allocation3], %s148
          %s150 = sshll.u32 [#allocation2], 4
          %s151 = int_to_ptr.vmem [resolvable:$true] %s150
          %156 = dma.hbm_to_vmem [thread:$0]  %s2, 1024, %s151, [#allocation3], 64, 64, 4
        $region20: #{cbow_forward_batched.1} parent=11 // pred_fallthru
          _
        // Predicated region
        $region21: #{cbow_forward_batched.1} parent=11 // pred_check
          %p157 = pneg %p100
        $region22: #{cbow_forward_batched.1} parent=11 // pred_check_branch
          %159 = sbr.rel (%p157) target = $region24
        $region23: #{cbow_forward_batched.1} parent=11 // pred_region
          _
        $region24: #{cbow_forward_batched.1} parent=11 // pred_fallthru
          _
      $region12: #{cbow_forward_batched.1} parent=5 // pred_fallthru
        _
      %p160 = scmp.lt.s32.totalorder %s11, 2
      // Predicated region
      $region25: #{cbow_forward_batched.1} parent=5 // pred_check
        %p161 = pneg %p160
      $region26: #{cbow_forward_batched.1} parent=5 // pred_check_branch
        %163 = sbr.rel (%p161) target = $region28
      $region27: #{cbow_forward_batched.1} parent=5 // pred_region
        // Predicated region
        $region29: #{cbow_forward_batched.1} parent=27 // pred_check
          %p164 = pneg %p31
        $region30: #{cbow_forward_batched.1} parent=27 // pred_check_branch
          %166 = sbr.rel (%p164) target = $region32
        $region31: #{cbow_forward_batched.1} parent=27 // pred_region
          %s167 = smul.u32 16, %s11
          %p168 = scmp.lt.s32.totalorder %s167, 31
          %s169 = scalar_select %p168, %s167, 31
          %s170 = smul.addr %s169, 8
          %s171 = scalar_lea.vmem %s0, %s170
          %s172 = smul.u32 16, %s11
        $region32: #{cbow_forward_batched.1} parent=27 // pred_fallthru
          _
      $region28: #{cbow_forward_batched.1} parent=5 // pred_fallthru
        _
      %p173 = scmp.le.s32.totalorder 1, %s11
      %p174 = scmp.lt.s32.totalorder %s11, 3
      %p175 = pnand %p173, %p174
      %p176 = pneg %p175
      // Predicated region
      $region33: #{cbow_forward_batched.1} parent=5 // pred_check
        _
      $region34: #{cbow_forward_batched.1} parent=5 // pred_check_branch
        %178 = sbr.rel (%p175) target = $region36
      $region35: #{cbow_forward_batched.1} parent=5 // pred_region
        %s179 = ssub.s32 %s11, 1
        // Predicated region
        $region37: #{cbow_forward_batched.1} parent=35 // pred_check
          %p180 = pneg %p79
        $region38: #{cbow_forward_batched.1} parent=35 // pred_check_branch
          %182 = sbr.rel (%p180) target = $region40
        $region39: #{cbow_forward_batched.1} parent=35 // pred_region
          %183 = dma.done [#allocation3], 1024
        $region40: #{cbow_forward_batched.1} parent=35 // pred_fallthru
          _
        %s184 = smul.u32 16, %s16
        %p185 = scmp.lt.s32.totalorder %s184, 31
        %s186 = scalar_select %p185, %s184, 31
        %s187 = smul.addr %s186, 8
        %s188 = scalar_lea.vmem %s0, %s187
        %p189 = pneg %p37
        %p190 = pneg %p34
        %p191 = pneg %p58
        %p192 = pneg %p55
        %p193 = pneg %p79
        %p194 = pneg %p76
        %p195 = pneg %p100
        %p196 = pneg %p97
        %p197 = pneg %p126
        %p198 = pneg %p123
        %s199 = smul.u32 16, %s16
        %p200 = scmp.lt.s32.totalorder %s199, 31
        %s201 = scalar_select %p200, %s199, 31
        %s202 = smul.addr %s201, 8
        %s203 = scalar_lea.vmem %s4, %s202
        %s204 = smul.u32 16, %s16
        %p205 = scmp.lt.s32.totalorder %s204, 31
        %s206 = scalar_select %p205, %s204, 31
        %s207 = smul.addr %s206, 8
        %s208 = scalar_lea.vmem %s0, %s207
        %s209 = smul.u32 16, %s16
        %s210 = smul.u32 16, %s16
        %p211 = scmp.lt.s32.totalorder %s210, 31
        %s212 = scalar_select %p211, %s210, 31
        %s213 = smul.addr %s212, 8
        %s214 = scalar_lea.vmem %s4, %s213
        %s215 = smul.u32 16, %s16
        %v217 = vld [vmem:[%s208] sm:$0xff]
        %v218 = vld [vmem:[%s208 + $0x8] sm:$0xff]
        %v219 = vld [vmem:[%s208 + $0x10] sm:$0xff]
        %v220 = vld [vmem:[%s208 + $0x18] sm:$0xff]
        %v221 = vld [vmem:[%s208 + $0x20] sm:$0xff]
        %v222 = vld [vmem:[%s208 + $0x28] sm:$0xff]
        %v223 = vld [vmem:[%s208 + $0x30] sm:$0xff]
        %v224 = vld [vmem:[%s208 + $0x38] sm:$0xff]
        %v225 = vld [vmem:[%s208 + $0x40] sm:$0xff]
        %v226 = vld [vmem:[%s208 + $0x48] sm:$0xff]
        %v227 = vld [vmem:[%s208 + $0x50] sm:$0xff]
        %v228 = vld [vmem:[%s208 + $0x58] sm:$0xff]
        %v229 = vld [vmem:[%s208 + $0x60] sm:$0xff]
        %v230 = vld [vmem:[%s208 + $0x68] sm:$0xff]
        %v231 = vld [vmem:[%s208 + $0x70] sm:$0xff]
        %v232 = vld [vmem:[%s208 + $0x78] sm:$0xff]
        %v233 = vlaneseq
        %v234 = vand.u32 %v233, 127
        %v235 = vadd.s32 %v234, 128
        %v236 = vadd.s32 %v234, 256
        %v237 = vadd.s32 %v234, 384
        %238 = vset.pattern.permute.xlu0 0
        %239 = vperm.xlu0 %238, %v217
        %v240 = vpop.permute.xlu0 %239
        %241 = vset.pattern.permute.xlu0 0
        %242 = vperm.xlu0 %241, %v218
        %v243 = vpop.permute.xlu0 %242
        %244 = vset.pattern.permute.xlu0 0
        %245 = vperm.xlu0 %244, %v219
        %v246 = vpop.permute.xlu0 %245
        %247 = vset.pattern.permute.xlu0 0
        %248 = vperm.xlu0 %247, %v220
        %v249 = vpop.permute.xlu0 %248
        %250 = vset.pattern.permute.xlu0 0
        %251 = vperm.xlu0 %250, %v221
        %v252 = vpop.permute.xlu0 %251
        %253 = vset.pattern.permute.xlu0 0
        %254 = vperm.xlu0 %253, %v222
        %v255 = vpop.permute.xlu0 %254
        %256 = vset.pattern.permute.xlu0 0
        %257 = vperm.xlu0 %256, %v223
        %v258 = vpop.permute.xlu0 %257
        %259 = vset.pattern.permute.xlu0 0
        %260 = vperm.xlu0 %259, %v224
        %v261 = vpop.permute.xlu0 %260
        %262 = vset.pattern.permute.xlu0 0
        %263 = vperm.xlu0 %262, %v225
        %v264 = vpop.permute.xlu0 %263
        %265 = vset.pattern.permute.xlu0 0
        %266 = vperm.xlu0 %265, %v226
        %v267 = vpop.permute.xlu0 %266
        %268 = vset.pattern.permute.xlu0 0
        %269 = vperm.xlu0 %268, %v227
        %v270 = vpop.permute.xlu0 %269
        %271 = vset.pattern.permute.xlu0 0
        %272 = vperm.xlu0 %271, %v228
        %v273 = vpop.permute.xlu0 %272
        %274 = vset.pattern.permute.xlu0 0
        %275 = vperm.xlu0 %274, %v229
        %v276 = vpop.permute.xlu0 %275
        %277 = vset.pattern.permute.xlu0 0
        %278 = vperm.xlu0 %277, %v230
        %v279 = vpop.permute.xlu0 %278
        %280 = vset.pattern.permute.xlu0 0
        %281 = vperm.xlu0 %280, %v231
        %v282 = vpop.permute.xlu0 %281
        %283 = vset.pattern.permute.xlu0 0
        %284 = vperm.xlu0 %283, %v232
        %v285 = vpop.permute.xlu0 %284
        %vm286 = vcmp.eq.s32.totalorder %v234, %v240
        %vm287 = vcmp.eq.s32.totalorder %v235, %v240
        %vm288 = vcmp.eq.s32.totalorder %v236, %v240
        %vm289 = vcmp.eq.s32.totalorder %v237, %v240
        %vm290 = vcmp.eq.s32.totalorder %v234, %v243
        %vm291 = vcmp.eq.s32.totalorder %v235, %v243
        %vm292 = vcmp.eq.s32.totalorder %v236, %v243
        %vm293 = vcmp.eq.s32.totalorder %v237, %v243
        %vm294 = vcmp.eq.s32.totalorder %v234, %v246
        %vm295 = vcmp.eq.s32.totalorder %v235, %v246
        %vm296 = vcmp.eq.s32.totalorder %v236, %v246
        %vm297 = vcmp.eq.s32.totalorder %v237, %v246
        %vm298 = vcmp.eq.s32.totalorder %v234, %v249
        %vm299 = vcmp.eq.s32.totalorder %v235, %v249
        %vm300 = vcmp.eq.s32.totalorder %v236, %v249
        %vm301 = vcmp.eq.s32.totalorder %v237, %v249
        %vm302 = vcmp.eq.s32.totalorder %v234, %v252
        %vm303 = vcmp.eq.s32.totalorder %v235, %v252
        %vm304 = vcmp.eq.s32.totalorder %v236, %v252
        %vm305 = vcmp.eq.s32.totalorder %v237, %v252
        %vm306 = vcmp.eq.s32.totalorder %v234, %v255
        %vm307 = vcmp.eq.s32.totalorder %v235, %v255
        %vm308 = vcmp.eq.s32.totalorder %v236, %v255
        %vm309 = vcmp.eq.s32.totalorder %v237, %v255
        %vm310 = vcmp.eq.s32.totalorder %v234, %v258
        %vm311 = vcmp.eq.s32.totalorder %v235, %v258
        %vm312 = vcmp.eq.s32.totalorder %v236, %v258
        %vm313 = vcmp.eq.s32.totalorder %v237, %v258
        %vm314 = vcmp.eq.s32.totalorder %v234, %v261
        %vm315 = vcmp.eq.s32.totalorder %v235, %v261
        %vm316 = vcmp.eq.s32.totalorder %v236, %v261
        %vm317 = vcmp.eq.s32.totalorder %v237, %v261
        %vm318 = vcmp.eq.s32.totalorder %v234, %v264
        %vm319 = vcmp.eq.s32.totalorder %v235, %v264
        %vm320 = vcmp.eq.s32.totalorder %v236, %v264
        %vm321 = vcmp.eq.s32.totalorder %v237, %v264
        %vm322 = vcmp.eq.s32.totalorder %v234, %v267
        %vm323 = vcmp.eq.s32.totalorder %v235, %v267
        %vm324 = vcmp.eq.s32.totalorder %v236, %v267
        %vm325 = vcmp.eq.s32.totalorder %v237, %v267
        %vm326 = vcmp.eq.s32.totalorder %v234, %v270
        %vm327 = vcmp.eq.s32.totalorder %v235, %v270
        %vm328 = vcmp.eq.s32.totalorder %v236, %v270
        %vm329 = vcmp.eq.s32.totalorder %v237, %v270
        %vm330 = vcmp.eq.s32.totalorder %v234, %v273
        %vm331 = vcmp.eq.s32.totalorder %v235, %v273
        %vm332 = vcmp.eq.s32.totalorder %v236, %v273
        %vm333 = vcmp.eq.s32.totalorder %v237, %v273
        %vm334 = vcmp.eq.s32.totalorder %v234, %v276
        %vm335 = vcmp.eq.s32.totalorder %v235, %v276
        %vm336 = vcmp.eq.s32.totalorder %v236, %v276
        %vm337 = vcmp.eq.s32.totalorder %v237, %v276
        %vm338 = vcmp.eq.s32.totalorder %v234, %v279
        %vm339 = vcmp.eq.s32.totalorder %v235, %v279
        %vm340 = vcmp.eq.s32.totalorder %v236, %v279
        %vm341 = vcmp.eq.s32.totalorder %v237, %v279
        %vm342 = vcmp.eq.s32.totalorder %v234, %v282
        %vm343 = vcmp.eq.s32.totalorder %v235, %v282
        %vm344 = vcmp.eq.s32.totalorder %v236, %v282
        %vm345 = vcmp.eq.s32.totalorder %v237, %v282
        %vm346 = vcmp.eq.s32.totalorder %v234, %v285
        %vm347 = vcmp.eq.s32.totalorder %v235, %v285
        %vm348 = vcmp.eq.s32.totalorder %v236, %v285
        %vm349 = vcmp.eq.s32.totalorder %v237, %v285
        %v350 = vadd.s32 %v217, 128
        %v351 = vadd.s32 %v218, 128
        %v352 = vadd.s32 %v219, 128
        %v353 = vadd.s32 %v220, 128
        %v354 = vadd.s32 %v221, 128
        %v355 = vadd.s32 %v222, 128
        %v356 = vadd.s32 %v223, 128
        %v357 = vadd.s32 %v224, 128
        %v358 = vadd.s32 %v225, 128
        %v359 = vadd.s32 %v226, 128
        %v360 = vadd.s32 %v227, 128
        %v361 = vadd.s32 %v228, 128
        %v362 = vadd.s32 %v229, 128
        %v363 = vadd.s32 %v230, 128
        %v364 = vadd.s32 %v231, 128
        %v365 = vadd.s32 %v232, 128
        %366 = vset.pattern.permute.xlu0 1
        %367 = vperm.xlu0 %366, %v350
        %v368 = vpop.permute.xlu0 %367
        %369 = vset.pattern.permute.xlu0 1
        %370 = vperm.xlu0 %369, %v351
        %v371 = vpop.permute.xlu0 %370
        %372 = vset.pattern.permute.xlu0 1
        %373 = vperm.xlu0 %372, %v352
        %v374 = vpop.permute.xlu0 %373
        %375 = vset.pattern.permute.xlu0 1
        %376 = vperm.xlu0 %375, %v353
        %v377 = vpop.permute.xlu0 %376
        %378 = vset.pattern.permute.xlu0 1
        %379 = vperm.xlu0 %378, %v354
        %v380 = vpop.permute.xlu0 %379
        %381 = vset.pattern.permute.xlu0 1
        %382 = vperm.xlu0 %381, %v355
        %v383 = vpop.permute.xlu0 %382
        %384 = vset.pattern.permute.xlu0 1
        %385 = vperm.xlu0 %384, %v356
        %v386 = vpop.permute.xlu0 %385
        %387 = vset.pattern.permute.xlu0 1
        %388 = vperm.xlu0 %387, %v357
        %v389 = vpop.permute.xlu0 %388
        %390 = vset.pattern.permute.xlu0 1
        %391 = vperm.xlu0 %390, %v358
        %v392 = vpop.permute.xlu0 %391
        %393 = vset.pattern.permute.xlu0 1
        %394 = vperm.xlu0 %393, %v359
        %v395 = vpop.permute.xlu0 %394
        %396 = vset.pattern.permute.xlu0 1
        %397 = vperm.xlu0 %396, %v360
        %v398 = vpop.permute.xlu0 %397
        %399 = vset.pattern.permute.xlu0 1
        %400 = vperm.xlu0 %399, %v361
        %v401 = vpop.permute.xlu0 %400
        %402 = vset.pattern.permute.xlu0 1
        %403 = vperm.xlu0 %402, %v362
        %v404 = vpop.permute.xlu0 %403
        %405 = vset.pattern.permute.xlu0 1
        %406 = vperm.xlu0 %405, %v363
        %v407 = vpop.permute.xlu0 %406
        %408 = vset.pattern.permute.xlu0 1
        %409 = vperm.xlu0 %408, %v364
        %v410 = vpop.permute.xlu0 %409
        %411 = vset.pattern.permute.xlu0 1
        %412 = vperm.xlu0 %411, %v365
        %v413 = vpop.permute.xlu0 %412
        %vm414 = vcmp.eq.s32.totalorder %v234, %v368
        %vm415 = vcmp.eq.s32.totalorder %v235, %v368
        %vm416 = vcmp.eq.s32.totalorder %v236, %v368
        %vm417 = vcmp.eq.s32.totalorder %v237, %v368
        %vm418 = vcmp.eq.s32.totalorder %v234, %v371
        %vm419 = vcmp.eq.s32.totalorder %v235, %v371
        %vm420 = vcmp.eq.s32.totalorder %v236, %v371
        %vm421 = vcmp.eq.s32.totalorder %v237, %v371
        %vm422 = vcmp.eq.s32.totalorder %v234, %v374
        %vm423 = vcmp.eq.s32.totalorder %v235, %v374
        %vm424 = vcmp.eq.s32.totalorder %v236, %v374
        %vm425 = vcmp.eq.s32.totalorder %v237, %v374
        %vm426 = vcmp.eq.s32.totalorder %v234, %v377
        %vm427 = vcmp.eq.s32.totalorder %v235, %v377
        %vm428 = vcmp.eq.s32.totalorder %v236, %v377
        %vm429 = vcmp.eq.s32.totalorder %v237, %v377
        %vm430 = vcmp.eq.s32.totalorder %v234, %v380
        %vm431 = vcmp.eq.s32.totalorder %v235, %v380
        %vm432 = vcmp.eq.s32.totalorder %v236, %v380
        %vm433 = vcmp.eq.s32.totalorder %v237, %v380
        %vm434 = vcmp.eq.s32.totalorder %v234, %v383
        %vm435 = vcmp.eq.s32.totalorder %v235, %v383
        %vm436 = vcmp.eq.s32.totalorder %v236, %v383
        %vm437 = vcmp.eq.s32.totalorder %v237, %v383
        %vm438 = vcmp.eq.s32.totalorder %v234, %v386
        %vm439 = vcmp.eq.s32.totalorder %v235, %v386
        %vm440 = vcmp.eq.s32.totalorder %v236, %v386
        %vm441 = vcmp.eq.s32.totalorder %v237, %v386
        %vm442 = vcmp.eq.s32.totalorder %v234, %v389
        %vm443 = vcmp.eq.s32.totalorder %v235, %v389
        %vm444 = vcmp.eq.s32.totalorder %v236, %v389
        %vm445 = vcmp.eq.s32.totalorder %v237, %v389
        %vm446 = vcmp.eq.s32.totalorder %v234, %v392
        %vm447 = vcmp.eq.s32.totalorder %v235, %v392
        %vm448 = vcmp.eq.s32.totalorder %v236, %v392
        %vm449 = vcmp.eq.s32.totalorder %v237, %v392
        %vm450 = vcmp.eq.s32.totalorder %v234, %v395
        %vm451 = vcmp.eq.s32.totalorder %v235, %v395
        %vm452 = vcmp.eq.s32.totalorder %v236, %v395
        %vm453 = vcmp.eq.s32.totalorder %v237, %v395
        %vm454 = vcmp.eq.s32.totalorder %v234, %v398
        %vm455 = vcmp.eq.s32.totalorder %v235, %v398
        %vm456 = vcmp.eq.s32.totalorder %v236, %v398
        %vm457 = vcmp.eq.s32.totalorder %v237, %v398
        %vm458 = vcmp.eq.s32.totalorder %v234, %v401
        %vm459 = vcmp.eq.s32.totalorder %v235, %v401
        %vm460 = vcmp.eq.s32.totalorder %v236, %v401
        %vm461 = vcmp.eq.s32.totalorder %v237, %v401
        %vm462 = vcmp.eq.s32.totalorder %v234, %v404
        %vm463 = vcmp.eq.s32.totalorder %v235, %v404
        %vm464 = vcmp.eq.s32.totalorder %v236, %v404
        %vm465 = vcmp.eq.s32.totalorder %v237, %v404
        %vm466 = vcmp.eq.s32.totalorder %v234, %v407
        %vm467 = vcmp.eq.s32.totalorder %v235, %v407
        %vm468 = vcmp.eq.s32.totalorder %v236, %v407
        %vm469 = vcmp.eq.s32.totalorder %v237, %v407
        %vm470 = vcmp.eq.s32.totalorder %v234, %v410
        %vm471 = vcmp.eq.s32.totalorder %v235, %v410
        %vm472 = vcmp.eq.s32.totalorder %v236, %v410
        %vm473 = vcmp.eq.s32.totalorder %v237, %v410
        %vm474 = vcmp.eq.s32.totalorder %v234, %v413
        %vm475 = vcmp.eq.s32.totalorder %v235, %v413
        %vm476 = vcmp.eq.s32.totalorder %v236, %v413
        %vm477 = vcmp.eq.s32.totalorder %v237, %v413
        %vm478 = vmor %vm286, %vm414
        %vm479 = vmor %vm287, %vm415
        %vm480 = vmor %vm288, %vm416
        %vm481 = vmor %vm289, %vm417
        %vm482 = vmor %vm290, %vm418
        %vm483 = vmor %vm291, %vm419
        %vm484 = vmor %vm292, %vm420
        %vm485 = vmor %vm293, %vm421
        %vm486 = vmor %vm294, %vm422
        %vm487 = vmor %vm295, %vm423
        %vm488 = vmor %vm296, %vm424
        %vm489 = vmor %vm297, %vm425
        %vm490 = vmor %vm298, %vm426
        %vm491 = vmor %vm299, %vm427
        %vm492 = vmor %vm300, %vm428
        %vm493 = vmor %vm301, %vm429
        %vm494 = vmor %vm302, %vm430
        %vm495 = vmor %vm303, %vm431
        %vm496 = vmor %vm304, %vm432
        %vm497 = vmor %vm305, %vm433
        %vm498 = vmor %vm306, %vm434
        %vm499 = vmor %vm307, %vm435
        %vm500 = vmor %vm308, %vm436
        %vm501 = vmor %vm309, %vm437
        %vm502 = vmor %vm310, %vm438
        %vm503 = vmor %vm311, %vm439
        %vm504 = vmor %vm312, %vm440
        %vm505 = vmor %vm313, %vm441
        %vm506 = vmor %vm314, %vm442
        %vm507 = vmor %vm315, %vm443
        %vm508 = vmor %vm316, %vm444
        %vm509 = vmor %vm317, %vm445
        %vm510 = vmor %vm318, %vm446
        %vm511 = vmor %vm319, %vm447
        %vm512 = vmor %vm320, %vm448
        %vm513 = vmor %vm321, %vm449
        %vm514 = vmor %vm322, %vm450
        %vm515 = vmor %vm323, %vm451
        %vm516 = vmor %vm324, %vm452
        %vm517 = vmor %vm325, %vm453
        %vm518 = vmor %vm326, %vm454
        %vm519 = vmor %vm327, %vm455
        %vm520 = vmor %vm328, %vm456
        %vm521 = vmor %vm329, %vm457
        %vm522 = vmor %vm330, %vm458
        %vm523 = vmor %vm331, %vm459
        %vm524 = vmor %vm332, %vm460
        %vm525 = vmor %vm333, %vm461
        %vm526 = vmor %vm334, %vm462
        %vm527 = vmor %vm335, %vm463
        %vm528 = vmor %vm336, %vm464
        %vm529 = vmor %vm337, %vm465
        %vm530 = vmor %vm338, %vm466
        %vm531 = vmor %vm339, %vm467
        %vm532 = vmor %vm340, %vm468
        %vm533 = vmor %vm341, %vm469
        %vm534 = vmor %vm342, %vm470
        %vm535 = vmor %vm343, %vm471
        %vm536 = vmor %vm344, %vm472
        %vm537 = vmor %vm345, %vm473
        %vm538 = vmor %vm346, %vm474
        %vm539 = vmor %vm347, %vm475
        %vm540 = vmor %vm348, %vm476
        %vm541 = vmor %vm349, %vm477
        %v542 = vadd.s32 %v217, 256
        %v543 = vadd.s32 %v218, 256
        %v544 = vadd.s32 %v219, 256
        %v545 = vadd.s32 %v220, 256
        %v546 = vadd.s32 %v221, 256
        %v547 = vadd.s32 %v222, 256
        %v548 = vadd.s32 %v223, 256
        %v549 = vadd.s32 %v224, 256
        %v550 = vadd.s32 %v225, 256
        %v551 = vadd.s32 %v226, 256
        %v552 = vadd.s32 %v227, 256
        %v553 = vadd.s32 %v228, 256
        %v554 = vadd.s32 %v229, 256
        %v555 = vadd.s32 %v230, 256
        %v556 = vadd.s32 %v231, 256
        %v557 = vadd.s32 %v232, 256
        %558 = vset.pattern.permute.xlu0 2
        %559 = vperm.xlu0 %558, %v542
        %v560 = vpop.permute.xlu0 %559
        %561 = vset.pattern.permute.xlu0 2
        %562 = vperm.xlu0 %561, %v543
        %v563 = vpop.permute.xlu0 %562
        %564 = vset.pattern.permute.xlu0 2
        %565 = vperm.xlu0 %564, %v544
        %v566 = vpop.permute.xlu0 %565
        %567 = vset.pattern.permute.xlu0 2
        %568 = vperm.xlu0 %567, %v545
        %v569 = vpop.permute.xlu0 %568
        %570 = vset.pattern.permute.xlu0 2
        %571 = vperm.xlu0 %570, %v546
        %v572 = vpop.permute.xlu0 %571
        %573 = vset.pattern.permute.xlu0 2
        %574 = vperm.xlu0 %573, %v547
        %v575 = vpop.permute.xlu0 %574
        %576 = vset.pattern.permute.xlu0 2
        %577 = vperm.xlu0 %576, %v548
        %v578 = vpop.permute.xlu0 %577
        %579 = vset.pattern.permute.xlu0 2
        %580 = vperm.xlu0 %579, %v549
        %v581 = vpop.permute.xlu0 %580
        %582 = vset.pattern.permute.xlu0 2
        %583 = vperm.xlu0 %582, %v550
        %v584 = vpop.permute.xlu0 %583
        %585 = vset.pattern.permute.xlu0 2
        %586 = vperm.xlu0 %585, %v551
        %v587 = vpop.permute.xlu0 %586
        %588 = vset.pattern.permute.xlu0 2
        %589 = vperm.xlu0 %588, %v552
        %v590 = vpop.permute.xlu0 %589
        %591 = vset.pattern.permute.xlu0 2
        %592 = vperm.xlu0 %591, %v553
        %v593 = vpop.permute.xlu0 %592
        %594 = vset.pattern.permute.xlu0 2
        %595 = vperm.xlu0 %594, %v554
        %v596 = vpop.permute.xlu0 %595
        %597 = vset.pattern.permute.xlu0 2
        %598 = vperm.xlu0 %597, %v555
        %v599 = vpop.permute.xlu0 %598
        %600 = vset.pattern.permute.xlu0 2
        %601 = vperm.xlu0 %600, %v556
        %v602 = vpop.permute.xlu0 %601
        %603 = vset.pattern.permute.xlu0 2
        %604 = vperm.xlu0 %603, %v557
        %v605 = vpop.permute.xlu0 %604
        %vm606 = vcmp.eq.s32.totalorder %v234, %v560
        %vm607 = vcmp.eq.s32.totalorder %v235, %v560
        %vm608 = vcmp.eq.s32.totalorder %v236, %v560
        %vm609 = vcmp.eq.s32.totalorder %v237, %v560
        %vm610 = vcmp.eq.s32.totalorder %v234, %v563
        %vm611 = vcmp.eq.s32.totalorder %v235, %v563
        %vm612 = vcmp.eq.s32.totalorder %v236, %v563
        %vm613 = vcmp.eq.s32.totalorder %v237, %v563
        %vm614 = vcmp.eq.s32.totalorder %v234, %v566
        %vm615 = vcmp.eq.s32.totalorder %v235, %v566
        %vm616 = vcmp.eq.s32.totalorder %v236, %v566
        %vm617 = vcmp.eq.s32.totalorder %v237, %v566
        %vm618 = vcmp.eq.s32.totalorder %v234, %v569
        %vm619 = vcmp.eq.s32.totalorder %v235, %v569
        %vm620 = vcmp.eq.s32.totalorder %v236, %v569
        %vm621 = vcmp.eq.s32.totalorder %v237, %v569
        %vm622 = vcmp.eq.s32.totalorder %v234, %v572
        %vm623 = vcmp.eq.s32.totalorder %v235, %v572
        %vm624 = vcmp.eq.s32.totalorder %v236, %v572
        %vm625 = vcmp.eq.s32.totalorder %v237, %v572
        %vm626 = vcmp.eq.s32.totalorder %v234, %v575
        %vm627 = vcmp.eq.s32.totalorder %v235, %v575
        %vm628 = vcmp.eq.s32.totalorder %v236, %v575
        %vm629 = vcmp.eq.s32.totalorder %v237, %v575
        %vm630 = vcmp.eq.s32.totalorder %v234, %v578
        %vm631 = vcmp.eq.s32.totalorder %v235, %v578
        %vm632 = vcmp.eq.s32.totalorder %v236, %v578
        %vm633 = vcmp.eq.s32.totalorder %v237, %v578
        %vm634 = vcmp.eq.s32.totalorder %v234, %v581
        %vm635 = vcmp.eq.s32.totalorder %v235, %v581
        %vm636 = vcmp.eq.s32.totalorder %v236, %v581
        %vm637 = vcmp.eq.s32.totalorder %v237, %v581
        %vm638 = vcmp.eq.s32.totalorder %v234, %v584
        %vm639 = vcmp.eq.s32.totalorder %v235, %v584
        %vm640 = vcmp.eq.s32.totalorder %v236, %v584
        %vm641 = vcmp.eq.s32.totalorder %v237, %v584
        %vm642 = vcmp.eq.s32.totalorder %v234, %v587
        %vm643 = vcmp.eq.s32.totalorder %v235, %v587
        %vm644 = vcmp.eq.s32.totalorder %v236, %v587
        %vm645 = vcmp.eq.s32.totalorder %v237, %v587
        %vm646 = vcmp.eq.s32.totalorder %v234, %v590
        %vm647 = vcmp.eq.s32.totalorder %v235, %v590
        %vm648 = vcmp.eq.s32.totalorder %v236, %v590
        %vm649 = vcmp.eq.s32.totalorder %v237, %v590
        %vm650 = vcmp.eq.s32.totalorder %v234, %v593
        %vm651 = vcmp.eq.s32.totalorder %v235, %v593
        %vm652 = vcmp.eq.s32.totalorder %v236, %v593
        %vm653 = vcmp.eq.s32.totalorder %v237, %v593
        %vm654 = vcmp.eq.s32.totalorder %v234, %v596
        %vm655 = vcmp.eq.s32.totalorder %v235, %v596
        %vm656 = vcmp.eq.s32.totalorder %v236, %v596
        %vm657 = vcmp.eq.s32.totalorder %v237, %v596
        %vm658 = vcmp.eq.s32.totalorder %v234, %v599
        %vm659 = vcmp.eq.s32.totalorder %v235, %v599
        %vm660 = vcmp.eq.s32.totalorder %v236, %v599
        %vm661 = vcmp.eq.s32.totalorder %v237, %v599
        %vm662 = vcmp.eq.s32.totalorder %v234, %v602
        %vm663 = vcmp.eq.s32.totalorder %v235, %v602
        %vm664 = vcmp.eq.s32.totalorder %v236, %v602
        %vm665 = vcmp.eq.s32.totalorder %v237, %v602
        %vm666 = vcmp.eq.s32.totalorder %v234, %v605
        %vm667 = vcmp.eq.s32.totalorder %v235, %v605
        %vm668 = vcmp.eq.s32.totalorder %v236, %v605
        %vm669 = vcmp.eq.s32.totalorder %v237, %v605
        %vm670 = vmor %vm478, %vm606
        %vm671 = vmor %vm479, %vm607
        %vm672 = vmor %vm480, %vm608
        %vm673 = vmor %vm481, %vm609
        %vm674 = vmor %vm482, %vm610
        %vm675 = vmor %vm483, %vm611
        %vm676 = vmor %vm484, %vm612
        %vm677 = vmor %vm485, %vm613
        %vm678 = vmor %vm486, %vm614
        %vm679 = vmor %vm487, %vm615
        %vm680 = vmor %vm488, %vm616
        %vm681 = vmor %vm489, %vm617
        %vm682 = vmor %vm490, %vm618
        %vm683 = vmor %vm491, %vm619
        %vm684 = vmor %vm492, %vm620
        %vm685 = vmor %vm493, %vm621
        %vm686 = vmor %vm494, %vm622
        %vm687 = vmor %vm495, %vm623
        %vm688 = vmor %vm496, %vm624
        %vm689 = vmor %vm497, %vm625
        %vm690 = vmor %vm498, %vm626
        %vm691 = vmor %vm499, %vm627
        %vm692 = vmor %vm500, %vm628
        %vm693 = vmor %vm501, %vm629
        %vm694 = vmor %vm502, %vm630
        %vm695 = vmor %vm503, %vm631
        %vm696 = vmor %vm504, %vm632
        %vm697 = vmor %vm505, %vm633
        %vm698 = vmor %vm506, %vm634
        %vm699 = vmor %vm507, %vm635
        %vm700 = vmor %vm508, %vm636
        %vm701 = vmor %vm509, %vm637
        %vm702 = vmor %vm510, %vm638
        %vm703 = vmor %vm511, %vm639
        %vm704 = vmor %vm512, %vm640
        %vm705 = vmor %vm513, %vm641
        %vm706 = vmor %vm514, %vm642
        %vm707 = vmor %vm515, %vm643
        %vm708 = vmor %vm516, %vm644
        %vm709 = vmor %vm517, %vm645
        %vm710 = vmor %vm518, %vm646
        %vm711 = vmor %vm519, %vm647
        %vm712 = vmor %vm520, %vm648
        %vm713 = vmor %vm521, %vm649
        %vm714 = vmor %vm522, %vm650
        %vm715 = vmor %vm523, %vm651
        %vm716 = vmor %vm524, %vm652
        %vm717 = vmor %vm525, %vm653
        %vm718 = vmor %vm526, %vm654
        %vm719 = vmor %vm527, %vm655
        %vm720 = vmor %vm528, %vm656
        %vm721 = vmor %vm529, %vm657
        %vm722 = vmor %vm530, %vm658
        %vm723 = vmor %vm531, %vm659
        %vm724 = vmor %vm532, %vm660
        %vm725 = vmor %vm533, %vm661
        %vm726 = vmor %vm534, %vm662
        %vm727 = vmor %vm535, %vm663
        %vm728 = vmor %vm536, %vm664
        %vm729 = vmor %vm537, %vm665
        %vm730 = vmor %vm538, %vm666
        %vm731 = vmor %vm539, %vm667
        %vm732 = vmor %vm540, %vm668
        %vm733 = vmor %vm541, %vm669
        %v734 = vadd.s32 %v217, 384
        %v735 = vadd.s32 %v218, 384
        %v736 = vadd.s32 %v219, 384
        %v737 = vadd.s32 %v220, 384
        %v738 = vadd.s32 %v221, 384
        %v739 = vadd.s32 %v222, 384
        %v740 = vadd.s32 %v223, 384
        %v741 = vadd.s32 %v224, 384
        %v742 = vadd.s32 %v225, 384
        %v743 = vadd.s32 %v226, 384
        %v744 = vadd.s32 %v227, 384
        %v745 = vadd.s32 %v228, 384
        %v746 = vadd.s32 %v229, 384
        %v747 = vadd.s32 %v230, 384
        %v748 = vadd.s32 %v231, 384
        %v749 = vadd.s32 %v232, 384
        %750 = vset.pattern.permute.xlu0 3
        %751 = vperm.xlu0 %750, %v734
        %v752 = vpop.permute.xlu0 %751
        %753 = vset.pattern.permute.xlu0 3
        %754 = vperm.xlu0 %753, %v735
        %v755 = vpop.permute.xlu0 %754
        %756 = vset.pattern.permute.xlu0 3
        %757 = vperm.xlu0 %756, %v736
        %v758 = vpop.permute.xlu0 %757
        %759 = vset.pattern.permute.xlu0 3
        %760 = vperm.xlu0 %759, %v737
        %v761 = vpop.permute.xlu0 %760
        %762 = vset.pattern.permute.xlu0 3
        %763 = vperm.xlu0 %762, %v738
        %v764 = vpop.permute.xlu0 %763
        %765 = vset.pattern.permute.xlu0 3
        %766 = vperm.xlu0 %765, %v739
        %v767 = vpop.permute.xlu0 %766
        %768 = vset.pattern.permute.xlu0 3
        %769 = vperm.xlu0 %768, %v740
        %v770 = vpop.permute.xlu0 %769
        %771 = vset.pattern.permute.xlu0 3
        %772 = vperm.xlu0 %771, %v741
        %v773 = vpop.permute.xlu0 %772
        %774 = vset.pattern.permute.xlu0 3
        %775 = vperm.xlu0 %774, %v742
        %v776 = vpop.permute.xlu0 %775
        %777 = vset.pattern.permute.xlu0 3
        %778 = vperm.xlu0 %777, %v743
        %v779 = vpop.permute.xlu0 %778
        %780 = vset.pattern.permute.xlu0 3
        %781 = vperm.xlu0 %780, %v744
        %v782 = vpop.permute.xlu0 %781
        %783 = vset.pattern.permute.xlu0 3
        %784 = vperm.xlu0 %783, %v745
        %v785 = vpop.permute.xlu0 %784
        %786 = vset.pattern.permute.xlu0 3
        %787 = vperm.xlu0 %786, %v746
        %v788 = vpop.permute.xlu0 %787
        %789 = vset.pattern.permute.xlu0 3
        %790 = vperm.xlu0 %789, %v747
        %v791 = vpop.permute.xlu0 %790
        %792 = vset.pattern.permute.xlu0 3
        %793 = vperm.xlu0 %792, %v748
        %v794 = vpop.permute.xlu0 %793
        %795 = vset.pattern.permute.xlu0 3
        %796 = vperm.xlu0 %795, %v749
        %v797 = vpop.permute.xlu0 %796
        %vm798 = vcmp.eq.s32.totalorder %v234, %v752
        %vm799 = vcmp.eq.s32.totalorder %v235, %v752
        %vm800 = vcmp.eq.s32.totalorder %v236, %v752
        %vm801 = vcmp.eq.s32.totalorder %v237, %v752
        %vm802 = vcmp.eq.s32.totalorder %v234, %v755
        %vm803 = vcmp.eq.s32.totalorder %v235, %v755
        %vm804 = vcmp.eq.s32.totalorder %v236, %v755
        %vm805 = vcmp.eq.s32.totalorder %v237, %v755
        %vm806 = vcmp.eq.s32.totalorder %v234, %v758
        %vm807 = vcmp.eq.s32.totalorder %v235, %v758
        %vm808 = vcmp.eq.s32.totalorder %v236, %v758
        %vm809 = vcmp.eq.s32.totalorder %v237, %v758
        %vm810 = vcmp.eq.s32.totalorder %v234, %v761
        %vm811 = vcmp.eq.s32.totalorder %v235, %v761
        %vm812 = vcmp.eq.s32.totalorder %v236, %v761
        %vm813 = vcmp.eq.s32.totalorder %v237, %v761
        %vm814 = vcmp.eq.s32.totalorder %v234, %v764
        %vm815 = vcmp.eq.s32.totalorder %v235, %v764
        %vm816 = vcmp.eq.s32.totalorder %v236, %v764
        %vm817 = vcmp.eq.s32.totalorder %v237, %v764
        %vm818 = vcmp.eq.s32.totalorder %v234, %v767
        %vm819 = vcmp.eq.s32.totalorder %v235, %v767
        %vm820 = vcmp.eq.s32.totalorder %v236, %v767
        %vm821 = vcmp.eq.s32.totalorder %v237, %v767
        %vm822 = vcmp.eq.s32.totalorder %v234, %v770
        %vm823 = vcmp.eq.s32.totalorder %v235, %v770
        %vm824 = vcmp.eq.s32.totalorder %v236, %v770
        %vm825 = vcmp.eq.s32.totalorder %v237, %v770
        %vm826 = vcmp.eq.s32.totalorder %v234, %v773
        %vm827 = vcmp.eq.s32.totalorder %v235, %v773
        %vm828 = vcmp.eq.s32.totalorder %v236, %v773
        %vm829 = vcmp.eq.s32.totalorder %v237, %v773
        %vm830 = vcmp.eq.s32.totalorder %v234, %v776
        %vm831 = vcmp.eq.s32.totalorder %v235, %v776
        %vm832 = vcmp.eq.s32.totalorder %v236, %v776
        %vm833 = vcmp.eq.s32.totalorder %v237, %v776
        %vm834 = vcmp.eq.s32.totalorder %v234, %v779
        %vm835 = vcmp.eq.s32.totalorder %v235, %v779
        %vm836 = vcmp.eq.s32.totalorder %v236, %v779
        %vm837 = vcmp.eq.s32.totalorder %v237, %v779
        %vm838 = vcmp.eq.s32.totalorder %v234, %v782
        %vm839 = vcmp.eq.s32.totalorder %v235, %v782
        %vm840 = vcmp.eq.s32.totalorder %v236, %v782
        %vm841 = vcmp.eq.s32.totalorder %v237, %v782
        %vm842 = vcmp.eq.s32.totalorder %v234, %v785
        %vm843 = vcmp.eq.s32.totalorder %v235, %v785
        %vm844 = vcmp.eq.s32.totalorder %v236, %v785
        %vm845 = vcmp.eq.s32.totalorder %v237, %v785
        %vm846 = vcmp.eq.s32.totalorder %v234, %v788
        %vm847 = vcmp.eq.s32.totalorder %v235, %v788
        %vm848 = vcmp.eq.s32.totalorder %v236, %v788
        %vm849 = vcmp.eq.s32.totalorder %v237, %v788
        %vm850 = vcmp.eq.s32.totalorder %v234, %v791
        %vm851 = vcmp.eq.s32.totalorder %v235, %v791
        %vm852 = vcmp.eq.s32.totalorder %v236, %v791
        %vm853 = vcmp.eq.s32.totalorder %v237, %v791
        %vm854 = vcmp.eq.s32.totalorder %v234, %v794
        %vm855 = vcmp.eq.s32.totalorder %v235, %v794
        %vm856 = vcmp.eq.s32.totalorder %v236, %v794
        %vm857 = vcmp.eq.s32.totalorder %v237, %v794
        %vm858 = vcmp.eq.s32.totalorder %v234, %v797
        %vm859 = vcmp.eq.s32.totalorder %v235, %v797
        %vm860 = vcmp.eq.s32.totalorder %v236, %v797
        %vm861 = vcmp.eq.s32.totalorder %v237, %v797
        %vm862 = vmor %vm670, %vm798
        %vm863 = vmor %vm671, %vm799
        %vm864 = vmor %vm672, %vm800
        %vm865 = vmor %vm673, %vm801
        %vm866 = vmor %vm674, %vm802
        %vm867 = vmor %vm675, %vm803
        %vm868 = vmor %vm676, %vm804
        %vm869 = vmor %vm677, %vm805
        %vm870 = vmor %vm678, %vm806
        %vm871 = vmor %vm679, %vm807
        %vm872 = vmor %vm680, %vm808
        %vm873 = vmor %vm681, %vm809
        %vm874 = vmor %vm682, %vm810
        %vm875 = vmor %vm683, %vm811
        %vm876 = vmor %vm684, %vm812
        %vm877 = vmor %vm685, %vm813
        %vm878 = vmor %vm686, %vm814
        %vm879 = vmor %vm687, %vm815
        %vm880 = vmor %vm688, %vm816
        %vm881 = vmor %vm689, %vm817
        %vm882 = vmor %vm690, %vm818
        %vm883 = vmor %vm691, %vm819
        %vm884 = vmor %vm692, %vm820
        %vm885 = vmor %vm693, %vm821
        %vm886 = vmor %vm694, %vm822
        %vm887 = vmor %vm695, %vm823
        %vm888 = vmor %vm696, %vm824
        %vm889 = vmor %vm697, %vm825
        %vm890 = vmor %vm698, %vm826
        %vm891 = vmor %vm699, %vm827
        %vm892 = vmor %vm700, %vm828
        %vm893 = vmor %vm701, %vm829
        %vm894 = vmor %vm702, %vm830
        %vm895 = vmor %vm703, %vm831
        %vm896 = vmor %vm704, %vm832
        %vm897 = vmor %vm705, %vm833
        %vm898 = vmor %vm706, %vm834
        %vm899 = vmor %vm707, %vm835
        %vm900 = vmor %vm708, %vm836
        %vm901 = vmor %vm709, %vm837
        %vm902 = vmor %vm710, %vm838
        %vm903 = vmor %vm711, %vm839
        %vm904 = vmor %vm712, %vm840
        %vm905 = vmor %vm713, %vm841
        %vm906 = vmor %vm714, %vm842
        %vm907 = vmor %vm715, %vm843
        %vm908 = vmor %vm716, %vm844
        %vm909 = vmor %vm717, %vm845
        %vm910 = vmor %vm718, %vm846
        %vm911 = vmor %vm719, %vm847
        %vm912 = vmor %vm720, %vm848
        %vm913 = vmor %vm721, %vm849
        %vm914 = vmor %vm722, %vm850
        %vm915 = vmor %vm723, %vm851
        %vm916 = vmor %vm724, %vm852
        %vm917 = vmor %vm725, %vm853
        %vm918 = vmor %vm726, %vm854
        %vm919 = vmor %vm727, %vm855
        %vm920 = vmor %vm728, %vm856
        %vm921 = vmor %vm729, %vm857
        %vm922 = vmor %vm730, %vm858
        %vm923 = vmor %vm731, %vm859
        %vm924 = vmor %vm732, %vm860
        %vm925 = vmor %vm733, %vm861
        %v926 = vsel %vm862, 1, 0
        %v927 = vsel %vm863, 1, 0
        %v928 = vsel %vm864, 1, 0
        %v929 = vsel %vm865, 1, 0
        %v930 = vsel %vm866, 1, 0
        %v931 = vsel %vm867, 1, 0
        %v932 = vsel %vm868, 1, 0
        %v933 = vsel %vm869, 1, 0
        %v934 = vsel %vm870, 1, 0
        %v935 = vsel %vm871, 1, 0
        %v936 = vsel %vm872, 1, 0
        %v937 = vsel %vm873, 1, 0
        %v938 = vsel %vm874, 1, 0
        %v939 = vsel %vm875, 1, 0
        %v940 = vsel %vm876, 1, 0
        %v941 = vsel %vm877, 1, 0
        %v942 = vsel %vm878, 1, 0
        %v943 = vsel %vm879, 1, 0
        %v944 = vsel %vm880, 1, 0
        %v945 = vsel %vm881, 1, 0
        %v946 = vsel %vm882, 1, 0
        %v947 = vsel %vm883, 1, 0
        %v948 = vsel %vm884, 1, 0
        %v949 = vsel %vm885, 1, 0
        %v950 = vsel %vm886, 1, 0
        %v951 = vsel %vm887, 1, 0
        %v952 = vsel %vm888, 1, 0
        %v953 = vsel %vm889, 1, 0
        %v954 = vsel %vm890, 1, 0
        %v955 = vsel %vm891, 1, 0
        %v956 = vsel %vm892, 1, 0
        %v957 = vsel %vm893, 1, 0
        %v958 = vsel %vm894, 1, 0
        %v959 = vsel %vm895, 1, 0
        %v960 = vsel %vm896, 1, 0
        %v961 = vsel %vm897, 1, 0
        %v962 = vsel %vm898, 1, 0
        %v963 = vsel %vm899, 1, 0
        %v964 = vsel %vm900, 1, 0
        %v965 = vsel %vm901, 1, 0
        %v966 = vsel %vm902, 1, 0
        %v967 = vsel %vm903, 1, 0
        %v968 = vsel %vm904, 1, 0
        %v969 = vsel %vm905, 1, 0
        %v970 = vsel %vm906, 1, 0
        %v971 = vsel %vm907, 1, 0
        %v972 = vsel %vm908, 1, 0
        %v973 = vsel %vm909, 1, 0
        %v974 = vsel %vm910, 1, 0
        %v975 = vsel %vm911, 1, 0
        %v976 = vsel %vm912, 1, 0
        %v977 = vsel %vm913, 1, 0
        %v978 = vsel %vm914, 1, 0
        %v979 = vsel %vm915, 1, 0
        %v980 = vsel %vm916, 1, 0
        %v981 = vsel %vm917, 1, 0
        %v982 = vsel %vm918, 1, 0
        %v983 = vsel %vm919, 1, 0
        %v984 = vsel %vm920, 1, 0
        %v985 = vsel %vm921, 1, 0
        %v986 = vsel %vm922, 1, 0
        %v987 = vsel %vm923, 1, 0
        %v988 = vsel %vm924, 1, 0
        %v989 = vsel %vm925, 1, 0
        %v990 = vcvt.s32.f32 %v926
        %v991 = vcvt.s32.f32 %v927
        %v992 = vcvt.s32.f32 %v928
        %v993 = vcvt.s32.f32 %v929
        %v994 = vcvt.s32.f32 %v930
        %v995 = vcvt.s32.f32 %v931
        %v996 = vcvt.s32.f32 %v932
        %v997 = vcvt.s32.f32 %v933
        %v998 = vcvt.s32.f32 %v934
        %v999 = vcvt.s32.f32 %v935
        %v1000 = vcvt.s32.f32 %v936
        %v1001 = vcvt.s32.f32 %v937
        %v1002 = vcvt.s32.f32 %v938
        %v1003 = vcvt.s32.f32 %v939
        %v1004 = vcvt.s32.f32 %v940
        %v1005 = vcvt.s32.f32 %v941
        %v1006 = vcvt.s32.f32 %v942
        %v1007 = vcvt.s32.f32 %v943
        %v1008 = vcvt.s32.f32 %v944
        %v1009 = vcvt.s32.f32 %v945
        %v1010 = vcvt.s32.f32 %v946
        %v1011 = vcvt.s32.f32 %v947
        %v1012 = vcvt.s32.f32 %v948
        %v1013 = vcvt.s32.f32 %v949
        %v1014 = vcvt.s32.f32 %v950
        %v1015 = vcvt.s32.f32 %v951
        %v1016 = vcvt.s32.f32 %v952
        %v1017 = vcvt.s32.f32 %v953
        %v1018 = vcvt.s32.f32 %v954
        %v1019 = vcvt.s32.f32 %v955
        %v1020 = vcvt.s32.f32 %v956
        %v1021 = vcvt.s32.f32 %v957
        %v1022 = vcvt.s32.f32 %v958
        %v1023 = vcvt.s32.f32 %v959
        %v1024 = vcvt.s32.f32 %v960
        %v1025 = vcvt.s32.f32 %v961
        %v1026 = vcvt.s32.f32 %v962
        %v1027 = vcvt.s32.f32 %v963
        %v1028 = vcvt.s32.f32 %v964
        %v1029 = vcvt.s32.f32 %v965
        %v1030 = vcvt.s32.f32 %v966
        %v1031 = vcvt.s32.f32 %v967
        %v1032 = vcvt.s32.f32 %v968
        %v1033 = vcvt.s32.f32 %v969
        %v1034 = vcvt.s32.f32 %v970
        %v1035 = vcvt.s32.f32 %v971
        %v1036 = vcvt.s32.f32 %v972
        %v1037 = vcvt.s32.f32 %v973
        %v1038 = vcvt.s32.f32 %v974
        %v1039 = vcvt.s32.f32 %v975
        %v1040 = vcvt.s32.f32 %v976
        %v1041 = vcvt.s32.f32 %v977
        %v1042 = vcvt.s32.f32 %v978
        %v1043 = vcvt.s32.f32 %v979
        %v1044 = vcvt.s32.f32 %v980
        %v1045 = vcvt.s32.f32 %v981
        %v1046 = vcvt.s32.f32 %v982
        %v1047 = vcvt.s32.f32 %v983
        %v1048 = vcvt.s32.f32 %v984
        %v1049 = vcvt.s32.f32 %v985
        %v1050 = vcvt.s32.f32 %v986
        %v1051 = vcvt.s32.f32 %v987
        %v1052 = vcvt.s32.f32 %v988
        %v1053 = vcvt.s32.f32 %v989
        %v1054 = vpack.c.bf16 %v994, %v990
        %v1055 = vpack.c.bf16 %v995, %v991
        %v1056 = vpack.c.bf16 %v996, %v992
        %v1057 = vpack.c.bf16 %v997, %v993
        %v1058 = vpack.c.bf16 %v1002, %v998
        %v1059 = vpack.c.bf16 %v1003, %v999
        %v1060 = vpack.c.bf16 %v1004, %v1000
        %v1061 = vpack.c.bf16 %v1005, %v1001
        %v1062 = vpack.c.bf16 %v1010, %v1006
        %v1063 = vpack.c.bf16 %v1011, %v1007
        %v1064 = vpack.c.bf16 %v1012, %v1008
        %v1065 = vpack.c.bf16 %v1013, %v1009
        %v1066 = vpack.c.bf16 %v1018, %v1014
        %v1067 = vpack.c.bf16 %v1019, %v1015
        %v1068 = vpack.c.bf16 %v1020, %v1016
        %v1069 = vpack.c.bf16 %v1021, %v1017
        %v1070 = vpack.c.bf16 %v1026, %v1022
        %v1071 = vpack.c.bf16 %v1027, %v1023
        %v1072 = vpack.c.bf16 %v1028, %v1024
        %v1073 = vpack.c.bf16 %v1029, %v1025
        %v1074 = vpack.c.bf16 %v1034, %v1030
        %v1075 = vpack.c.bf16 %v1035, %v1031
        %v1076 = vpack.c.bf16 %v1036, %v1032
        %v1077 = vpack.c.bf16 %v1037, %v1033
        %v1078 = vpack.c.bf16 %v1042, %v1038
        %v1079 = vpack.c.bf16 %v1043, %v1039
        %v1080 = vpack.c.bf16 %v1044, %v1040
        %v1081 = vpack.c.bf16 %v1045, %v1041
        %v1082 = vpack.c.bf16 %v1050, %v1046
        %v1083 = vpack.c.bf16 %v1051, %v1047
        %v1084 = vpack.c.bf16 %v1052, %v1048
        %v1085 = vpack.c.bf16 %v1053, %v1049
        %v1086 = vld [vmem:[%s1] sm:$0xf]
        %v1087 = vld [vmem:[%s1 + $0x4] sm:$0xf]
        %v1088 = vld [vmem:[%s1 + $0x8] sm:$0xf]
        %v1089 = vld [vmem:[%s1 + $0xc] sm:$0xf]
        %v1090 = vld [vmem:[%s1 + $0x10] sm:$0xf]
        %v1091 = vld [vmem:[%s1 + $0x14] sm:$0xf]
        %v1092 = vld [vmem:[%s1 + $0x18] sm:$0xf]
        %v1093 = vld [vmem:[%s1 + $0x1c] sm:$0xf]
        %v1094 = vld [vmem:[%s1 + $0x20] sm:$0xf]
        %v1095 = vld [vmem:[%s1 + $0x24] sm:$0xf]
        %v1096 = vld [vmem:[%s1 + $0x28] sm:$0xf]
        %v1097 = vld [vmem:[%s1 + $0x2c] sm:$0xf]
        %v1098 = vld [vmem:[%s1 + $0x30] sm:$0xf]
        %v1099 = vld [vmem:[%s1 + $0x34] sm:$0xf]
        %v1100 = vld [vmem:[%s1 + $0x38] sm:$0xf]
        %v1101 = vld [vmem:[%s1 + $0x3c] sm:$0xf]
        %v1102 = vld [vmem:[%s1 + $0x40] sm:$0xf]
        %v1103 = vld [vmem:[%s1 + $0x44] sm:$0xf]
        %v1104 = vld [vmem:[%s1 + $0x48] sm:$0xf]
        %v1105 = vld [vmem:[%s1 + $0x4c] sm:$0xf]
        %v1106 = vld [vmem:[%s1 + $0x50] sm:$0xf]
        %v1107 = vld [vmem:[%s1 + $0x54] sm:$0xf]
        %v1108 = vld [vmem:[%s1 + $0x58] sm:$0xf]
        %v1109 = vld [vmem:[%s1 + $0x5c] sm:$0xf]
        %v1110 = vld [vmem:[%s1 + $0x60] sm:$0xf]
        %v1111 = vld [vmem:[%s1 + $0x64] sm:$0xf]
        %v1112 = vld [vmem:[%s1 + $0x68] sm:$0xf]
        %v1113 = vld [vmem:[%s1 + $0x6c] sm:$0xf]
        %v1114 = vld [vmem:[%s1 + $0x70] sm:$0xf]
        %v1115 = vld [vmem:[%s1 + $0x74] sm:$0xf]
        %v1116 = vld [vmem:[%s1 + $0x78] sm:$0xf]
        %v1117 = vld [vmem:[%s1 + $0x7c] sm:$0xf]
        %v1118 = vld [vmem:[%s1 + $0x80] sm:$0xf]
        %v1119 = vld [vmem:[%s1 + $0x84] sm:$0xf]
        %v1120 = vld [vmem:[%s1 + $0x88] sm:$0xf]
        %v1121 = vld [vmem:[%s1 + $0x8c] sm:$0xf]
        %v1122 = vld [vmem:[%s1 + $0x90] sm:$0xf]
        %v1123 = vld [vmem:[%s1 + $0x94] sm:$0xf]
        %v1124 = vld [vmem:[%s1 + $0x98] sm:$0xf]
        %v1125 = vld [vmem:[%s1 + $0x9c] sm:$0xf]
        %v1126 = vld [vmem:[%s1 + $0xa0] sm:$0xf]
        %v1127 = vld [vmem:[%s1 + $0xa4] sm:$0xf]
        %v1128 = vld [vmem:[%s1 + $0xa8] sm:$0xf]
        %v1129 = vld [vmem:[%s1 + $0xac] sm:$0xf]
        %v1130 = vld [vmem:[%s1 + $0xb0] sm:$0xf]
        %v1131 = vld [vmem:[%s1 + $0xb4] sm:$0xf]
        %v1132 = vld [vmem:[%s1 + $0xb8] sm:$0xf]
        %v1133 = vld [vmem:[%s1 + $0xbc] sm:$0xf]
        %v1134 = vld [vmem:[%s1 + $0xc0] sm:$0xf]
        %v1135 = vld [vmem:[%s1 + $0xc4] sm:$0xf]
        %v1136 = vld [vmem:[%s1 + $0xc8] sm:$0xf]
        %v1137 = vld [vmem:[%s1 + $0xcc] sm:$0xf]
        %v1138 = vld [vmem:[%s1 + $0xd0] sm:$0xf]
        %v1139 = vld [vmem:[%s1 + $0xd4] sm:$0xf]
        %v1140 = vld [vmem:[%s1 + $0xd8] sm:$0xf]
        %v1141 = vld [vmem:[%s1 + $0xdc] sm:$0xf]
        %v1142 = vld [vmem:[%s1 + $0xe0] sm:$0xf]
        %v1143 = vld [vmem:[%s1 + $0xe4] sm:$0xf]
        %v1144 = vld [vmem:[%s1 + $0xe8] sm:$0xf]
        %v1145 = vld [vmem:[%s1 + $0xec] sm:$0xf]
        %v1146 = vld [vmem:[%s1 + $0xf0] sm:$0xf]
        %v1147 = vld [vmem:[%s1 + $0xf4] sm:$0xf]
        %v1148 = vld [vmem:[%s1 + $0xf8] sm:$0xf]
        %v1149 = vld [vmem:[%s1 + $0xfc] sm:$0xf]
        %v1150 = vld [vmem:[%s3] sm:$0x1]
        %v1151 = vlaneseq
        %v1152 = vshrl.u32 %v1151, 7
        %v1153 = vsub.s32 0, %v1152
        %v1154 = vrot.slane %v1150, %v1153
        %v1219 = vunpack.c.l.b16 %v1086
        %v1220 = vunpack.c.l.b16 %v1087
        %v1221 = vunpack.c.l.b16 %v1088
        %v1222 = vunpack.c.l.b16 %v1089
        %v1223 = vunpack.c.l.b16 %v1090
        %v1224 = vunpack.c.l.b16 %v1091
        %v1225 = vunpack.c.l.b16 %v1092
        %v1226 = vunpack.c.l.b16 %v1093
        %v1227 = vunpack.c.l.b16 %v1094
        %v1228 = vunpack.c.l.b16 %v1095
        %v1229 = vunpack.c.l.b16 %v1096
        %v1230 = vunpack.c.l.b16 %v1097
        %v1231 = vunpack.c.l.b16 %v1098
        %v1232 = vunpack.c.l.b16 %v1099
        %v1233 = vunpack.c.l.b16 %v1100
        %v1234 = vunpack.c.l.b16 %v1101
        %v1235 = vunpack.c.l.b16 %v1102
        %v1236 = vunpack.c.l.b16 %v1103
        %v1237 = vunpack.c.l.b16 %v1104
        %v1238 = vunpack.c.l.b16 %v1105
        %v1239 = vunpack.c.l.b16 %v1106
        %v1240 = vunpack.c.l.b16 %v1107
        %v1241 = vunpack.c.l.b16 %v1108
        %v1242 = vunpack.c.l.b16 %v1109
        %v1243 = vunpack.c.l.b16 %v1110
        %v1244 = vunpack.c.l.b16 %v1111
        %v1245 = vunpack.c.l.b16 %v1112
        %v1246 = vunpack.c.l.b16 %v1113
        %v1247 = vunpack.c.l.b16 %v1114
        %v1248 = vunpack.c.l.b16 %v1115
        %v1249 = vunpack.c.l.b16 %v1116
        %v1250 = vunpack.c.l.b16 %v1117
        %v1251 = vunpack.c.l.b16 %v1118
        %v1252 = vunpack.c.l.b16 %v1119
        %v1253 = vunpack.c.l.b16 %v1120
        %v1254 = vunpack.c.l.b16 %v1121
        %v1255 = vunpack.c.l.b16 %v1122
        %v1256 = vunpack.c.l.b16 %v1123
        %v1257 = vunpack.c.l.b16 %v1124
        %v1258 = vunpack.c.l.b16 %v1125
        %v1259 = vunpack.c.l.b16 %v1126
        %v1260 = vunpack.c.l.b16 %v1127
        %v1261 = vunpack.c.l.b16 %v1128
        %v1262 = vunpack.c.l.b16 %v1129
        %v1263 = vunpack.c.l.b16 %v1130
        %v1264 = vunpack.c.l.b16 %v1131
        %v1265 = vunpack.c.l.b16 %v1132
        %v1266 = vunpack.c.l.b16 %v1133
        %v1267 = vunpack.c.l.b16 %v1134
        %v1268 = vunpack.c.l.b16 %v1135
        %v1269 = vunpack.c.l.b16 %v1136
        %v1270 = vunpack.c.l.b16 %v1137
        %v1271 = vunpack.c.l.b16 %v1138
        %v1272 = vunpack.c.l.b16 %v1139
        %v1273 = vunpack.c.l.b16 %v1140
        %v1274 = vunpack.c.l.b16 %v1141
        %v1275 = vunpack.c.l.b16 %v1142
        %v1276 = vunpack.c.l.b16 %v1143
        %v1277 = vunpack.c.l.b16 %v1144
        %v1278 = vunpack.c.l.b16 %v1145
        %v1279 = vunpack.c.l.b16 %v1146
        %v1280 = vunpack.c.l.b16 %v1147
        %v1281 = vunpack.c.l.b16 %v1148
        %v1282 = vunpack.c.l.b16 %v1149
        %v1283 = vpack.c.b16 %v1220, %v1219
        %v1284 = vpack.c.b16 %v1222, %v1221
        %v1285 = vpack.c.b16 %v1224, %v1223
        %v1286 = vpack.c.b16 %v1226, %v1225
        %v1287 = vpack.c.b16 %v1228, %v1227
        %v1288 = vpack.c.b16 %v1230, %v1229
        %v1289 = vpack.c.b16 %v1232, %v1231
        %v1290 = vpack.c.b16 %v1234, %v1233
        %v1291 = vpack.c.b16 %v1236, %v1235
        %v1292 = vpack.c.b16 %v1238, %v1237
        %v1293 = vpack.c.b16 %v1240, %v1239
        %v1294 = vpack.c.b16 %v1242, %v1241
        %v1295 = vpack.c.b16 %v1244, %v1243
        %v1296 = vpack.c.b16 %v1246, %v1245
        %v1297 = vpack.c.b16 %v1248, %v1247
        %v1298 = vpack.c.b16 %v1250, %v1249
        %v1299 = vpack.c.b16 %v1252, %v1251
        %v1300 = vpack.c.b16 %v1254, %v1253
        %v1301 = vpack.c.b16 %v1256, %v1255
        %v1302 = vpack.c.b16 %v1258, %v1257
        %v1303 = vpack.c.b16 %v1260, %v1259
        %v1304 = vpack.c.b16 %v1262, %v1261
        %v1305 = vpack.c.b16 %v1264, %v1263
        %v1306 = vpack.c.b16 %v1266, %v1265
        %v1307 = vpack.c.b16 %v1268, %v1267
        %v1308 = vpack.c.b16 %v1270, %v1269
        %v1309 = vpack.c.b16 %v1272, %v1271
        %v1310 = vpack.c.b16 %v1274, %v1273
        %v1311 = vpack.c.b16 %v1276, %v1275
        %v1312 = vpack.c.b16 %v1278, %v1277
        %v1313 = vpack.c.b16 %v1280, %v1279
        %v1314 = vpack.c.b16 %v1282, %v1281
        %1347 = vmatprep.subr.bf16.mxu0 0
        %1348 = vmatpush1.bf16.msra.mxu0 %v1283
        %1349 = vmatprep.subr.bf16.mxu0 0
        %1350 = vmatpush1.bf16.msra.mxu0 %v1284
        %1351 = vmatprep.subr.bf16.mxu0 0
        %1352 = vmatpush1.bf16.msra.mxu0 %v1285
        %1353 = vmatprep.subr.bf16.mxu0 0
        %1354 = vmatpush1.bf16.msra.mxu0 %v1286
        %1355 = vmatprep.subr.bf16.mxu0 0
        %1356 = vmatpush1.bf16.msra.mxu0 %v1287
        %1357 = vmatprep.subr.bf16.mxu0 0
        %1358 = vmatpush1.bf16.msra.mxu0 %v1288
        %1359 = vmatprep.subr.bf16.mxu0 0
        %1360 = vmatpush1.bf16.msra.mxu0 %v1289
        %1361 = vmatprep.subr.bf16.mxu0 0
        %1362 = vmatpush1.bf16.msra.mxu0 %v1290
        %1363 = vmatprep.subr.bf16.mxu0 0
        %1364 = vmatpush1.bf16.msra.mxu0 %v1291
        %1365 = vmatprep.subr.bf16.mxu0 0
        %1366 = vmatpush1.bf16.msra.mxu0 %v1292
        %1367 = vmatprep.subr.bf16.mxu0 0
        %1368 = vmatpush1.bf16.msra.mxu0 %v1293
        %1369 = vmatprep.subr.bf16.mxu0 0
        %1370 = vmatpush1.bf16.msra.mxu0 %v1294
        %1371 = vmatprep.subr.bf16.mxu0 0
        %1372 = vmatpush1.bf16.msra.mxu0 %v1295
        %1373 = vmatprep.subr.bf16.mxu0 0
        %1374 = vmatpush1.bf16.msra.mxu0 %v1296
        %1375 = vmatprep.subr.bf16.mxu0 0
        %1376 = vmatpush1.bf16.msra.mxu0 %v1297
        %1377 = vmatprep.subr.bf16.mxu0 0
        %1378 = vmatpush1.bf16.msra.mxu0 %v1298
        %1379 = vmatprep.mubr.bf16.mxu0 %v1055
        %1380 = vmatmul.mubr.bf16.gmra.mrb[0].mxu0 %v1054
        %v1381 = vpop.f32.mrb[0].mxu0
        %v1382 = vadd.f32 %v1154, %v1381
        %v1383 = vpop.f32.mrb[0].mxu0
        %v1384 = vpop.f32.mrb[0].mxu0
        %v1385 = vadd.f32 %v1154, %v1384
        %v1386 = vpop.f32.mrb[0].mxu0
        %1387 = vmatprep.mubr.bf16.mxu0 %v1059
        %1388 = vmatmul.mubr.bf16.gmra.mrb[0].mxu0 %v1058
        %v1389 = vpop.f32.mrb[0].mxu0
        %v1390 = vadd.f32 %v1154, %v1389
        %v1391 = vpop.f32.mrb[0].mxu0
        %v1392 = vpop.f32.mrb[0].mxu0
        %v1393 = vadd.f32 %v1154, %v1392
        %v1394 = vpop.f32.mrb[0].mxu0
        %1395 = vmatprep.mubr.bf16.mxu0 %v1063
        %1396 = vmatmul.mubr.bf16.gmra.mrb[0].mxu0 %v1062
        %v1397 = vpop.f32.mrb[0].mxu0
        %v1398 = vadd.f32 %v1154, %v1397
        %v1399 = vpop.f32.mrb[0].mxu0
        %v1400 = vpop.f32.mrb[0].mxu0
        %v1401 = vadd.f32 %v1154, %v1400
        %v1402 = vpop.f32.mrb[0].mxu0
        %1403 = vmatprep.mubr.bf16.mxu0 %v1067
        %1404 = vmatmul.mubr.bf16.gmra.mrb[0].mxu0 %v1066
        %v1405 = vpop.f32.mrb[0].mxu0
        %v1406 = vadd.f32 %v1154, %v1405
        %v1407 = vpop.f32.mrb[0].mxu0
        %v1408 = vpop.f32.mrb[0].mxu0
        %v1409 = vadd.f32 %v1154, %v1408
        %v1410 = vpop.f32.mrb[0].mxu0
        %1411 = vmatprep.mubr.bf16.mxu0 %v1071
        %1412 = vmatmul.mubr.bf16.gmra.mrb[0].mxu0 %v1070
        %v1413 = vpop.f32.mrb[0].mxu0
        %v1414 = vadd.f32 %v1154, %v1413
        %v1415 = vpop.f32.mrb[0].mxu0
        %v1416 = vpop.f32.mrb[0].mxu0
        %v1417 = vadd.f32 %v1154, %v1416
        %v1418 = vpop.f32.mrb[0].mxu0
        %1419 = vmatprep.mubr.bf16.mxu0 %v1075
        %1420 = vmatmul.mubr.bf16.gmra.mrb[0].mxu0 %v1074
        %v1421 = vpop.f32.mrb[0].mxu0
        %v1422 = vadd.f32 %v1154, %v1421
        %v1423 = vpop.f32.mrb[0].mxu0
        %v1424 = vpop.f32.mrb[0].mxu0
        %v1425 = vadd.f32 %v1154, %v1424
        %v1426 = vpop.f32.mrb[0].mxu0
        %1427 = vmatprep.mubr.bf16.mxu0 %v1079
        %1428 = vmatmul.mubr.bf16.gmra.mrb[0].mxu0 %v1078
        %v1429 = vpop.f32.mrb[0].mxu0
        %v1430 = vadd.f32 %v1154, %v1429
        %v1431 = vpop.f32.mrb[0].mxu0
        %v1432 = vpop.f32.mrb[0].mxu0
        %v1433 = vadd.f32 %v1154, %v1432
        %v1434 = vpop.f32.mrb[0].mxu0
        %1435 = vmatprep.mubr.bf16.mxu0 %v1083
        %1436 = vmatmul.mubr.bf16.gmra.mrb[0].mxu0 %v1082
        %v1437 = vpop.f32.mrb[0].mxu0
        %v1438 = vadd.f32 %v1154, %v1437
        %v1439 = vpop.f32.mrb[0].mxu0
        %v1440 = vpop.f32.mrb[0].mxu0
        %v1441 = vadd.f32 %v1154, %v1440
        %v1442 = vpop.f32.mrb[0].mxu0
        %1443 = vdwg.mxu0
        %1444 = vmatprep.subr.bf16.mxu0 0
        %1445 = vmatpush1.bf16.msra.mxu0 %v1299
        %1446 = vmatprep.subr.bf16.mxu0 0
        %1447 = vmatpush1.bf16.msra.mxu0 %v1300
        %1448 = vmatprep.subr.bf16.mxu0 0
        %1449 = vmatpush1.bf16.msra.mxu0 %v1301
        %1450 = vmatprep.subr.bf16.mxu0 0
        %1451 = vmatpush1.bf16.msra.mxu0 %v1302
        %1452 = vmatprep.subr.bf16.mxu0 0
        %1453 = vmatpush1.bf16.msra.mxu0 %v1303
        %1454 = vmatprep.subr.bf16.mxu0 0
        %1455 = vmatpush1.bf16.msra.mxu0 %v1304
        %1456 = vmatprep.subr.bf16.mxu0 0
        %1457 = vmatpush1.bf16.msra.mxu0 %v1305
        %1458 = vmatprep.subr.bf16.mxu0 0
        %1459 = vmatpush1.bf16.msra.mxu0 %v1306
        %1460 = vmatprep.subr.bf16.mxu0 0
        %1461 = vmatpush1.bf16.msra.mxu0 %v1307
        %1462 = vmatprep.subr.bf16.mxu0 0
        %1463 = vmatpush1.bf16.msra.mxu0 %v1308
        %1464 = vmatprep.subr.bf16.mxu0 0
        %1465 = vmatpush1.bf16.msra.mxu0 %v1309
        %1466 = vmatprep.subr.bf16.mxu0 0
        %1467 = vmatpush1.bf16.msra.mxu0 %v1310
        %1468 = vmatprep.subr.bf16.mxu0 0
        %1469 = vmatpush1.bf16.msra.mxu0 %v1311
        %1470 = vmatprep.subr.bf16.mxu0 0
        %1471 = vmatpush1.bf16.msra.mxu0 %v1312
        %1472 = vmatprep.subr.bf16.mxu0 0
        %1473 = vmatpush1.bf16.msra.mxu0 %v1313
        %1474 = vmatprep.subr.bf16.mxu0 0
        %1475 = vmatpush1.bf16.msra.mxu0 %v1314
        %1476 = vmatprep.mubr.bf16.mxu0 %v1057
        %1477 = vmatmul.mubr.bf16.gmra.mrb[0].mxu0 %v1056
        %v1478 = vpop.f32.mrb[0].mxu0
        %v1479 = vadd.f32 %v1382, %v1478
        %v1480 = vpop.f32.mrb[0].mxu0
        %v1481 = vpop.f32.mrb[0].mxu0
        %v1482 = vadd.f32 %v1385, %v1481
        %v1483 = vpop.f32.mrb[0].mxu0
        %1484 = vmatprep.mubr.bf16.mxu0 %v1061
        %1485 = vmatmul.mubr.bf16.gmra.mrb[0].mxu0 %v1060
        %v1486 = vpop.f32.mrb[0].mxu0
        %v1487 = vadd.f32 %v1390, %v1486
        %v1488 = vpop.f32.mrb[0].mxu0
        %v1489 = vpop.f32.mrb[0].mxu0
        %v1490 = vadd.f32 %v1393, %v1489
        %v1491 = vpop.f32.mrb[0].mxu0
        %1492 = vmatprep.mubr.bf16.mxu0 %v1065
        %1493 = vmatmul.mubr.bf16.gmra.mrb[0].mxu0 %v1064
        %v1494 = vpop.f32.mrb[0].mxu0
        %v1495 = vadd.f32 %v1398, %v1494
        %v1496 = vpop.f32.mrb[0].mxu0
        %v1497 = vpop.f32.mrb[0].mxu0
        %v1498 = vadd.f32 %v1401, %v1497
        %v1499 = vpop.f32.mrb[0].mxu0
        %1500 = vmatprep.mubr.bf16.mxu0 %v1069
        %1501 = vmatmul.mubr.bf16.gmra.mrb[0].mxu0 %v1068
        %v1502 = vpop.f32.mrb[0].mxu0
        %v1503 = vadd.f32 %v1406, %v1502
        %v1504 = vpop.f32.mrb[0].mxu0
        %v1505 = vpop.f32.mrb[0].mxu0
        %v1506 = vadd.f32 %v1409, %v1505
        %v1507 = vpop.f32.mrb[0].mxu0
        %1508 = vmatprep.mubr.bf16.mxu0 %v1073
        %1509 = vmatmul.mubr.bf16.gmra.mrb[0].mxu0 %v1072
        %v1510 = vpop.f32.mrb[0].mxu0
        %v1511 = vadd.f32 %v1414, %v1510
        %v1512 = vpop.f32.mrb[0].mxu0
        %v1513 = vpop.f32.mrb[0].mxu0
        %v1514 = vadd.f32 %v1417, %v1513
        %v1515 = vpop.f32.mrb[0].mxu0
        %1516 = vmatprep.mubr.bf16.mxu0 %v1077
        %1517 = vmatmul.mubr.bf16.gmra.mrb[0].mxu0 %v1076
        %v1518 = vpop.f32.mrb[0].mxu0
        %v1519 = vadd.f32 %v1422, %v1518
        %v1520 = vpop.f32.mrb[0].mxu0
        %v1521 = vpop.f32.mrb[0].mxu0
        %v1522 = vadd.f32 %v1425, %v1521
        %v1523 = vpop.f32.mrb[0].mxu0
        %1524 = vmatprep.mubr.bf16.mxu0 %v1081
        %1525 = vmatmul.mubr.bf16.gmra.mrb[0].mxu0 %v1080
        %v1526 = vpop.f32.mrb[0].mxu0
        %v1527 = vadd.f32 %v1430, %v1526
        %v1528 = vpop.f32.mrb[0].mxu0
        %v1529 = vpop.f32.mrb[0].mxu0
        %v1530 = vadd.f32 %v1433, %v1529
        %v1531 = vpop.f32.mrb[0].mxu0
        %1532 = vmatprep.mubr.bf16.mxu0 %v1085
        %1533 = vmatmul.mubr.bf16.gmra.mrb[0].mxu0 %v1084
        %v1534 = vpop.f32.mrb[0].mxu0
        %v1535 = vadd.f32 %v1438, %v1534
        %v1536 = vpop.f32.mrb[0].mxu0
        %v1537 = vpop.f32.mrb[0].mxu0
        %v1538 = vadd.f32 %v1441, %v1537
        %v1539 = vpop.f32.mrb[0].mxu0
        %1540 = vdwg.mxu0
        %v1541 = vmax.f32 %v1479, 0.0
        %v1542 = vmax.f32 %v1482, 0.0
        %v1543 = vmax.f32 %v1487, 0.0
        %v1544 = vmax.f32 %v1490, 0.0
        %v1545 = vmax.f32 %v1495, 0.0
        %v1546 = vmax.f32 %v1498, 0.0
        %v1547 = vmax.f32 %v1503, 0.0
        %v1548 = vmax.f32 %v1506, 0.0
        %v1549 = vmax.f32 %v1511, 0.0
        %v1550 = vmax.f32 %v1514, 0.0
        %v1551 = vmax.f32 %v1519, 0.0
        %v1552 = vmax.f32 %v1522, 0.0
        %v1553 = vmax.f32 %v1527, 0.0
        %v1554 = vmax.f32 %v1530, 0.0
        %v1555 = vmax.f32 %v1535, 0.0
        %v1556 = vmax.f32 %v1538, 0.0
        %v1557 = vpack.c.bf16 %v1542, %v1541
        %v1558 = vpack.c.bf16 %v1544, %v1543
        %v1559 = vpack.c.bf16 %v1546, %v1545
        %v1560 = vpack.c.bf16 %v1548, %v1547
        %v1561 = vpack.c.bf16 %v1550, %v1549
        %v1562 = vpack.c.bf16 %v1552, %v1551
        %v1563 = vpack.c.bf16 %v1554, %v1553
        %v1564 = vpack.c.bf16 %v1556, %v1555
        %v1565 = vld [vmem:[#allocation2] sm:$0xf]
        %v1566 = vld [vmem:[#allocation2 + $0x4] sm:$0xf]
        %v1567 = vld [vmem:[#allocation2 + $0x8] sm:$0xf]
        %v1568 = vld [vmem:[#allocation2 + $0xc] sm:$0xf]
        %v1569 = vld [vmem:[#allocation2 + $0x10] sm:$0xf]
        %v1570 = vld [vmem:[#allocation2 + $0x14] sm:$0xf]
        %v1571 = vld [vmem:[#allocation2 + $0x18] sm:$0xf]
        %v1572 = vld [vmem:[#allocation2 + $0x1c] sm:$0xf]
        %v1573 = vld [vmem:[#allocation2 + $0x20] sm:$0xf]
        %v1574 = vld [vmem:[#allocation2 + $0x24] sm:$0xf]
        %v1575 = vld [vmem:[#allocation2 + $0x28] sm:$0xf]
        %v1576 = vld [vmem:[#allocation2 + $0x2c] sm:$0xf]
        %v1577 = vld [vmem:[#allocation2 + $0x30] sm:$0xf]
        %v1578 = vld [vmem:[#allocation2 + $0x34] sm:$0xf]
        %v1579 = vld [vmem:[#allocation2 + $0x38] sm:$0xf]
        %v1580 = vld [vmem:[#allocation2 + $0x3c] sm:$0xf]
        %v1581 = vld [vmem:[%s3 + $0x1] sm:$0x1]
        %v1582 = vlaneseq
        %v1583 = vshrl.u32 %v1582, 7
        %v1584 = vsub.s32 0, %v1583
        %v1585 = vrot.slane %v1581, %v1584
        %v1602 = vunpack.c.l.b16 %v1565
        %v1603 = vunpack.c.l.b16 %v1566
        %v1604 = vunpack.c.l.b16 %v1567
        %v1605 = vunpack.c.l.b16 %v1568
        %v1606 = vunpack.c.l.b16 %v1569
        %v1607 = vunpack.c.l.b16 %v1570
        %v1608 = vunpack.c.l.b16 %v1571
        %v1609 = vunpack.c.l.b16 %v1572
        %v1610 = vunpack.c.l.b16 %v1573
        %v1611 = vunpack.c.l.b16 %v1574
        %v1612 = vunpack.c.l.b16 %v1575
        %v1613 = vunpack.c.l.b16 %v1576
        %v1614 = vunpack.c.l.b16 %v1577
        %v1615 = vunpack.c.l.b16 %v1578
        %v1616 = vunpack.c.l.b16 %v1579
        %v1617 = vunpack.c.l.b16 %v1580
        %v1618 = vpack.c.b16 %v1603, %v1602
        %v1619 = vpack.c.b16 %v1605, %v1604
        %v1620 = vpack.c.b16 %v1607, %v1606
        %v1621 = vpack.c.b16 %v1609, %v1608
        %v1622 = vpack.c.b16 %v1611, %v1610
        %v1623 = vpack.c.b16 %v1613, %v1612
        %v1624 = vpack.c.b16 %v1615, %v1614
        %v1625 = vpack.c.b16 %v1617, %v1616
        %1634 = vmatprep.subr.bf16.mxu0 0
        %1635 = vmatpush1.bf16.msra.mxu0 %v1618
        %1636 = vmatprep.subr.bf16.mxu0 0
        %1637 = vmatpush1.bf16.msra.mxu0 %v1619
        %1638 = vmatprep.subr.bf16.mxu0 0
        %1639 = vmatpush1.bf16.msra.mxu0 %v1620
        %1640 = vmatprep.subr.bf16.mxu0 0
        %1641 = vmatpush1.bf16.msra.mxu0 %v1621
        %1642 = vmatprep.subr.bf16.mxu0 0
        %1643 = vmatpush1.bf16.msra.mxu0 %v1622
        %1644 = vmatprep.subr.bf16.mxu0 0
        %1645 = vmatpush1.bf16.msra.mxu0 %v1623
        %1646 = vmatprep.subr.bf16.mxu0 0
        %1647 = vmatpush1.bf16.msra.mxu0 %v1624
        %1648 = vmatprep.subr.bf16.mxu0 0
        %1649 = vmatpush1.bf16.msra.mxu0 %v1625
        %1650 = vmatprep.subr.bf16.mxu0 0
        %1651 = vmatpush1.bf16.msra.mxu0 0
        %1652 = vmatprep.subr.bf16.mxu0 0
        %1653 = vmatpush1.bf16.msra.mxu0 0
        %1654 = vmatprep.subr.bf16.mxu0 0
        %1655 = vmatpush1.bf16.msra.mxu0 0
        %1656 = vmatprep.subr.bf16.mxu0 0
        %1657 = vmatpush1.bf16.msra.mxu0 0
        %1658 = vmatprep.subr.bf16.mxu0 0
        %1659 = vmatpush1.bf16.msra.mxu0 0
        %1660 = vmatprep.subr.bf16.mxu0 0
        %1661 = vmatpush1.bf16.msra.mxu0 0
        %1662 = vmatprep.subr.bf16.mxu0 0
        %1663 = vmatpush1.bf16.msra.mxu0 0
        %1664 = vmatprep.subr.bf16.mxu0 0
        %1665 = vmatpush1.bf16.msra.mxu0 0
        %1666 = vmatprep.mubr.bf16.mxu0 0
        %1667 = vmatmul.mubr.bf16.gmra.mrb[0].mxu0 %v1557
        %v1668 = vpop.f32.mrb[0].mxu0
        %v1669 = vadd.f32 %v1585, %v1668
        %v1670 = vpop.f32.mrb[0].mxu0
        %v1671 = vpop.f32.mrb[0].mxu0
        %v1672 = vadd.f32 %v1585, %v1671
        %v1673 = vpop.f32.mrb[0].mxu0
        %1674 = vmatprep.mubr.bf16.mxu0 0
        %1675 = vmatmul.mubr.bf16.gmra.mrb[0].mxu0 %v1558
        %v1676 = vpop.f32.mrb[0].mxu0
        %v1677 = vadd.f32 %v1585, %v1676
        %v1678 = vpop.f32.mrb[0].mxu0
        %v1679 = vpop.f32.mrb[0].mxu0
        %v1680 = vadd.f32 %v1585, %v1679
        %v1681 = vpop.f32.mrb[0].mxu0
        %1682 = vmatprep.mubr.bf16.mxu0 0
        %1683 = vmatmul.mubr.bf16.gmra.mrb[0].mxu0 %v1559
        %v1684 = vpop.f32.mrb[0].mxu0
        %v1685 = vadd.f32 %v1585, %v1684
        %v1686 = vpop.f32.mrb[0].mxu0
        %v1687 = vpop.f32.mrb[0].mxu0
        %v1688 = vadd.f32 %v1585, %v1687
        %v1689 = vpop.f32.mrb[0].mxu0
        %1690 = vmatprep.mubr.bf16.mxu0 0
        %1691 = vmatmul.mubr.bf16.gmra.mrb[0].mxu0 %v1560
        %v1692 = vpop.f32.mrb[0].mxu0
        %v1693 = vadd.f32 %v1585, %v1692
        %v1694 = vpop.f32.mrb[0].mxu0
        %v1695 = vpop.f32.mrb[0].mxu0
        %v1696 = vadd.f32 %v1585, %v1695
        %v1697 = vpop.f32.mrb[0].mxu0
        %1698 = vmatprep.mubr.bf16.mxu0 0
        %1699 = vmatmul.mubr.bf16.gmra.mrb[0].mxu0 %v1561
        %v1700 = vpop.f32.mrb[0].mxu0
        %v1701 = vadd.f32 %v1585, %v1700
        %v1702 = vpop.f32.mrb[0].mxu0
        %v1703 = vpop.f32.mrb[0].mxu0
        %v1704 = vadd.f32 %v1585, %v1703
        %v1705 = vpop.f32.mrb[0].mxu0
        %1706 = vmatprep.mubr.bf16.mxu0 0
        %1707 = vmatmul.mubr.bf16.gmra.mrb[0].mxu0 %v1562
        %v1708 = vpop.f32.mrb[0].mxu0
        %v1709 = vadd.f32 %v1585, %v1708
        %v1710 = vpop.f32.mrb[0].mxu0
        %v1711 = vpop.f32.mrb[0].mxu0
        %v1712 = vadd.f32 %v1585, %v1711
        %v1713 = vpop.f32.mrb[0].mxu0
        %1714 = vmatprep.mubr.bf16.mxu0 0
        %1715 = vmatmul.mubr.bf16.gmra.mrb[0].mxu0 %v1563
        %v1716 = vpop.f32.mrb[0].mxu0
        %v1717 = vadd.f32 %v1585, %v1716
        %v1718 = vpop.f32.mrb[0].mxu0
        %v1719 = vpop.f32.mrb[0].mxu0
        %v1720 = vadd.f32 %v1585, %v1719
        %v1721 = vpop.f32.mrb[0].mxu0
        %1722 = vmatprep.mubr.bf16.mxu0 0
        %1723 = vmatmul.mubr.bf16.gmra.mrb[0].mxu0 %v1564
        %v1724 = vpop.f32.mrb[0].mxu0
        %v1725 = vadd.f32 %v1585, %v1724
        %v1726 = vpop.f32.mrb[0].mxu0
        %v1727 = vpop.f32.mrb[0].mxu0
        %v1728 = vadd.f32 %v1585, %v1727
        %v1729 = vpop.f32.mrb[0].mxu0
        %1730 = vdwg.mxu0
        %vm1731 = vcmp.lt.s32.totalorder %v234, 49
        %v1732 = vsel %vm1731, %v1669, -1e+30
        %v1733 = vsel %vm1731, %v1672, -1e+30
        %v1734 = vsel %vm1731, %v1677, -1e+30
        %v1735 = vsel %vm1731, %v1680, -1e+30
        %v1736 = vsel %vm1731, %v1685, -1e+30
        %v1737 = vsel %vm1731, %v1688, -1e+30
        %v1738 = vsel %vm1731, %v1693, -1e+30
        %v1739 = vsel %vm1731, %v1696, -1e+30
        %v1740 = vsel %vm1731, %v1701, -1e+30
        %v1741 = vsel %vm1731, %v1704, -1e+30
        %v1742 = vsel %vm1731, %v1709, -1e+30
        %v1743 = vsel %vm1731, %v1712, -1e+30
        %v1744 = vsel %vm1731, %v1717, -1e+30
        %v1745 = vsel %vm1731, %v1720, -1e+30
        %v1746 = vsel %vm1731, %v1725, -1e+30
        %v1747 = vsel %vm1731, %v1728, -1e+30
        %1748 = vmax.xlane.f32.xlu0 %v1732
        %v1749 = vpop.xlane.xlu0 %1748
        %1750 = vmax.xlane.f32.xlu0 %v1733
        %v1751 = vpop.xlane.xlu0 %1750
        %1752 = vmax.xlane.f32.xlu0 %v1734
        %v1753 = vpop.xlane.xlu0 %1752
        %1754 = vmax.xlane.f32.xlu0 %v1735
        %v1755 = vpop.xlane.xlu0 %1754
        %1756 = vmax.xlane.f32.xlu0 %v1736
        %v1757 = vpop.xlane.xlu0 %1756
        %1758 = vmax.xlane.f32.xlu0 %v1737
        %v1759 = vpop.xlane.xlu0 %1758
        %1760 = vmax.xlane.f32.xlu0 %v1738
        %v1761 = vpop.xlane.xlu0 %1760
        %1762 = vmax.xlane.f32.xlu0 %v1739
        %v1763 = vpop.xlane.xlu0 %1762
        %1764 = vmax.xlane.f32.xlu0 %v1740
        %v1765 = vpop.xlane.xlu0 %1764
        %1766 = vmax.xlane.f32.xlu0 %v1741
        %v1767 = vpop.xlane.xlu0 %1766
        %1768 = vmax.xlane.f32.xlu0 %v1742
        %v1769 = vpop.xlane.xlu0 %1768
        %1770 = vmax.xlane.f32.xlu0 %v1743
        %v1771 = vpop.xlane.xlu0 %1770
        %1772 = vmax.xlane.f32.xlu0 %v1744
        %v1773 = vpop.xlane.xlu0 %1772
        %1774 = vmax.xlane.f32.xlu0 %v1745
        %v1775 = vpop.xlane.xlu0 %1774
        %1776 = vmax.xlane.f32.xlu0 %v1746
        %v1777 = vpop.xlane.xlu0 %1776
        %1778 = vmax.xlane.f32.xlu0 %v1747
        %v1779 = vpop.xlane.xlu0 %1778
        %v1780 = vsub.f32 %v1732, %v1749
        %v1781 = vsub.f32 %v1733, %v1751
        %v1782 = vsub.f32 %v1734, %v1753
        %v1783 = vsub.f32 %v1735, %v1755
        %v1784 = vsub.f32 %v1736, %v1757
        %v1785 = vsub.f32 %v1737, %v1759
        %v1786 = vsub.f32 %v1738, %v1761
        %v1787 = vsub.f32 %v1739, %v1763
        %v1788 = vsub.f32 %v1740, %v1765
        %v1789 = vsub.f32 %v1741, %v1767
        %v1790 = vsub.f32 %v1742, %v1769
        %v1791 = vsub.f32 %v1743, %v1771
        %v1792 = vsub.f32 %v1744, %v1773
        %v1793 = vsub.f32 %v1745, %v1775
        %v1794 = vsub.f32 %v1746, %v1777
        %v1795 = vsub.f32 %v1747, %v1779
        %v1796 = vmul.f32 %v1780, 1.442695
        %v1797 = vpow.pop %v1796
        %v1798 = vmul.f32 %v1781, 1.442695
        %v1799 = vpow.pop %v1798
        %v1800 = vmul.f32 %v1782, 1.442695
        %v1801 = vpow.pop %v1800
        %v1802 = vmul.f32 %v1783, 1.442695
        %v1803 = vpow.pop %v1802
        %v1804 = vmul.f32 %v1784, 1.442695
        %v1805 = vpow.pop %v1804
        %v1806 = vmul.f32 %v1785, 1.442695
        %v1807 = vpow.pop %v1806
        %v1808 = vmul.f32 %v1786, 1.442695
        %v1809 = vpow.pop %v1808
        %v1810 = vmul.f32 %v1787, 1.442695
        %v1811 = vpow.pop %v1810
        %v1812 = vmul.f32 %v1788, 1.442695
        %v1813 = vpow.pop %v1812
        %v1814 = vmul.f32 %v1789, 1.442695
        %v1815 = vpow.pop %v1814
        %v1816 = vmul.f32 %v1790, 1.442695
        %v1817 = vpow.pop %v1816
        %v1818 = vmul.f32 %v1791, 1.442695
        %v1819 = vpow.pop %v1818
        %v1820 = vmul.f32 %v1792, 1.442695
        %v1821 = vpow.pop %v1820
        %v1822 = vmul.f32 %v1793, 1.442695
        %v1823 = vpow.pop %v1822
        %v1824 = vmul.f32 %v1794, 1.442695
        %v1825 = vpow.pop %v1824
        %v1826 = vmul.f32 %v1795, 1.442695
        %v1827 = vpow.pop %v1826
        %1828 = vadd.xlane.f32.xlu0 %v1797
        %v1829 = vpop.xlane.xlu0 %1828
        %1830 = vadd.xlane.f32.xlu0 %v1799
        %v1831 = vpop.xlane.xlu0 %1830
        %1832 = vadd.xlane.f32.xlu0 %v1801
        %v1833 = vpop.xlane.xlu0 %1832
        %1834 = vadd.xlane.f32.xlu0 %v1803
        %v1835 = vpop.xlane.xlu0 %1834
        %1836 = vadd.xlane.f32.xlu0 %v1805
        %v1837 = vpop.xlane.xlu0 %1836
        %1838 = vadd.xlane.f32.xlu0 %v1807
        %v1839 = vpop.xlane.xlu0 %1838
        %1840 = vadd.xlane.f32.xlu0 %v1809
        %v1841 = vpop.xlane.xlu0 %1840
        %1842 = vadd.xlane.f32.xlu0 %v1811
        %v1843 = vpop.xlane.xlu0 %1842
        %1844 = vadd.xlane.f32.xlu0 %v1813
        %v1845 = vpop.xlane.xlu0 %1844
        %1846 = vadd.xlane.f32.xlu0 %v1815
        %v1847 = vpop.xlane.xlu0 %1846
        %1848 = vadd.xlane.f32.xlu0 %v1817
        %v1849 = vpop.xlane.xlu0 %1848
        %1850 = vadd.xlane.f32.xlu0 %v1819
        %v1851 = vpop.xlane.xlu0 %1850
        %1852 = vadd.xlane.f32.xlu0 %v1821
        %v1853 = vpop.xlane.xlu0 %1852
        %1854 = vadd.xlane.f32.xlu0 %v1823
        %v1855 = vpop.xlane.xlu0 %1854
        %1856 = vadd.xlane.f32.xlu0 %v1825
        %v1857 = vpop.xlane.xlu0 %1856
        %1858 = vadd.xlane.f32.xlu0 %v1827
        %v1859 = vpop.xlane.xlu0 %1858
        %v1860 = vlog2.pop %v1829
        %v1861 = vmul.f32 %v1860, 0.6931472
        %v1862 = vlog2.pop %v1831
        %v1863 = vmul.f32 %v1862, 0.6931472
        %v1864 = vlog2.pop %v1833
        %v1865 = vmul.f32 %v1864, 0.6931472
        %v1866 = vlog2.pop %v1835
        %v1867 = vmul.f32 %v1866, 0.6931472
        %v1868 = vlog2.pop %v1837
        %v1869 = vmul.f32 %v1868, 0.6931472
        %v1870 = vlog2.pop %v1839
        %v1871 = vmul.f32 %v1870, 0.6931472
        %v1872 = vlog2.pop %v1841
        %v1873 = vmul.f32 %v1872, 0.6931472
        %v1874 = vlog2.pop %v1843
        %v1875 = vmul.f32 %v1874, 0.6931472
        %v1876 = vlog2.pop %v1845
        %v1877 = vmul.f32 %v1876, 0.6931472
        %v1878 = vlog2.pop %v1847
        %v1879 = vmul.f32 %v1878, 0.6931472
        %v1880 = vlog2.pop %v1849
        %v1881 = vmul.f32 %v1880, 0.6931472
        %v1882 = vlog2.pop %v1851
        %v1883 = vmul.f32 %v1882, 0.6931472
        %v1884 = vlog2.pop %v1853
        %v1885 = vmul.f32 %v1884, 0.6931472
        %v1886 = vlog2.pop %v1855
        %v1887 = vmul.f32 %v1886, 0.6931472
        %v1888 = vlog2.pop %v1857
        %v1889 = vmul.f32 %v1888, 0.6931472
        %v1890 = vlog2.pop %v1859
        %v1891 = vmul.f32 %v1890, 0.6931472
        %v1892 = vsub.f32 %v1780, %v1861
        %v1893 = vsub.f32 %v1781, %v1863
        %v1894 = vsub.f32 %v1782, %v1865
        %v1895 = vsub.f32 %v1783, %v1867
        %v1896 = vsub.f32 %v1784, %v1869
        %v1897 = vsub.f32 %v1785, %v1871
        %v1898 = vsub.f32 %v1786, %v1873
        %v1899 = vsub.f32 %v1787, %v1875
        %v1900 = vsub.f32 %v1788, %v1877
        %v1901 = vsub.f32 %v1789, %v1879
        %v1902 = vsub.f32 %v1790, %v1881
        %v1903 = vsub.f32 %v1791, %v1883
        %v1904 = vsub.f32 %v1792, %v1885
        %v1905 = vsub.f32 %v1793, %v1887
        %v1906 = vsub.f32 %v1794, %v1889
        %v1907 = vsub.f32 %v1795, %v1891
        %1908 = vst [vmem:[%s214] sm:$0xff] %v1892
        %1909 = vst [vmem:[%s214 + $0x8] sm:$0xff] %v1893
        %1910 = vst [vmem:[%s214 + $0x10] sm:$0xff] %v1894
        %1911 = vst [vmem:[%s214 + $0x18] sm:$0xff] %v1895
        %1912 = vst [vmem:[%s214 + $0x20] sm:$0xff] %v1896
        %1913 = vst [vmem:[%s214 + $0x28] sm:$0xff] %v1897
        %1914 = vst [vmem:[%s214 + $0x30] sm:$0xff] %v1898
        %1915 = vst [vmem:[%s214 + $0x38] sm:$0xff] %v1899
        %1916 = vst [vmem:[%s214 + $0x40] sm:$0xff] %v1900
        %1917 = vst [vmem:[%s214 + $0x48] sm:$0xff] %v1901
        %1918 = vst [vmem:[%s214 + $0x50] sm:$0xff] %v1902
        %1919 = vst [vmem:[%s214 + $0x58] sm:$0xff] %v1903
        %1920 = vst [vmem:[%s214 + $0x60] sm:$0xff] %v1904
        %1921 = vst [vmem:[%s214 + $0x68] sm:$0xff] %v1905
        %1922 = vst [vmem:[%s214 + $0x70] sm:$0xff] %v1906
        %1923 = vst [vmem:[%s214 + $0x78] sm:$0xff] %v1907
        %s1924 = smul.u32 16, %s16
        %p1925 = scmp.lt.s32.totalorder %s1924, 31
        %s1926 = scalar_select %p1925, %s1924, 31
        %s1927 = smul.addr %s1926, 8
        %s1928 = scalar_lea.vmem %s4, %s1927
        // Predicated region
        $region41: #{cbow_forward_batched.1} parent=35 // pred_check
          %p1929 = pneg %p123
        $region42: #{cbow_forward_batched.1} parent=35 // pred_check_branch
          %1931 = sbr.rel (%p1929) target = $region44
        $region43: #{cbow_forward_batched.1} parent=35 // pred_region
          %s1932 = smul.u32 16, %s16
        $region44: #{cbow_forward_batched.1} parent=35 // pred_fallthru
          _
      $region36: #{cbow_forward_batched.1} parent=5 // pred_fallthru
        _
      %p1933 = scmp.le.s32.totalorder 2, %s11
      // Predicated region
      $region45: #{cbow_forward_batched.1} parent=5 // pred_check
        %p1934 = pneg %p1933
      $region46: #{cbow_forward_batched.1} parent=5 // pred_check_branch
        %1936 = sbr.rel (%p1934) target = $region48
      $region47: #{cbow_forward_batched.1} parent=5 // pred_region
        %s1937 = ssub.s32 %s11, 2
        // Predicated region
        $region49: #{cbow_forward_batched.1} parent=47 // pred_check
          %p1938 = pneg %p129
        $region50: #{cbow_forward_batched.1} parent=47 // pred_check_branch
          %1940 = sbr.rel (%p1938) target = $region52
        $region51: #{cbow_forward_batched.1} parent=47 // pred_region
          %s1941 = smul.u32 16, %s17
          %p1942 = scmp.lt.s32.totalorder %s1941, 31
          %s1943 = scalar_select %p1942, %s1941, 31
          %s1944 = smul.addr %s1943, 8
          %s1945 = scalar_lea.vmem %s4, %s1944
        $region52: #{cbow_forward_batched.1} parent=47 // pred_fallthru
          _
      $region48: #{cbow_forward_batched.1} parent=5 // pred_fallthru
        _
    $region6: #{cbow_forward_batched.1} parent=1 // loop_footer
      %s15 = sadd.s32 1, %s11
    $region7: #{cbow_forward_batched.1} parent=1 // loop_footer_branch
      %10 = sbr.rel target = $region3
    $region8: #{cbow_forward_batched.1} parent=1 // loop_exit
      _
    %1946 = vsyncpa [#allocation3], 1
    %s1947 = scalar_lea.sflag [#allocation3], 1
    %1948 = vsyncpa %s1947, 1

</llo_original>
